<compile_context>
chip_gen: v5e
topology: v5e:2x2
jax: 0.10.0
libtpu: 0.0.40
codegen_flags: <defaults>
</compile_context>

<pallas_src>
import jax
import jax.numpy as jnp
from jax import lax
from jax.experimental import pallas as pl
from jax.experimental.pallas import tpu as pltpu


# ---------------------------------------------------------------------------
# Kernel
# ---------------------------------------------------------------------------
def aki_gru_attn_kernel(
    x_ref,          # (T*B, F)   time-major flattened input
    w_in1_ref,      # (F, 4H)    [Wir1 | Wiz1 | Win1 | Wres]
    b_in1_ref,      # (1, 4H)    [bir1+bhr1 | biz1+bhz1 | bin1 | bres]
    w_h1_ref,       # (H, 3H)    [Whr1 | Whz1 | Whn1]
    b_hn1_ref,      # (1, H)
    w2_ref,         # (2H, 4H)   [[Wir2 Wiz2 Win2 0 ]
                    #             [Whr2 Whz2 0    Whn2]]
    b2_ref,         # (1, 4H)    [bir2+bhr2 | biz2+bhz2 | bin2 | bhn2]
    w_attn_ref,     # (1, H)
    b_attn_ref,     # (1, 1)     SMEM
    gamma_ref,      # (1, H)
    beta_ref,       # (1, H)
    w_fc_ref,       # (H, C)
    b_fc_ref,       # (1, C)
    logits_ref,     # (B, C)     out
    attn_ref,       # (B, T)     out: attention weights (lane-dense)
    gi_ref,         # (T*B, 4H)  scratch: hoisted input projection
):
    B, T = attn_ref.shape
    H = w_h1_ref.shape[0]
    f32 = jnp.float32

    # --- hoisted input projection (GRU layer-1 input gates + residual path) ---
    gi_ref[...] = (
        jnp.dot(x_ref[...], w_in1_ref[...], preferred_element_type=f32)
        + b_in1_ref[...]
    )

    # --- hoist loop-invariant loads / broadcasts ------------------------------
    w_h1 = w_h1_ref[...]
    w2 = w2_ref[...]
    b_hn1 = jnp.broadcast_to(b_hn1_ref[...], (B, H))
    b2 = jnp.broadcast_to(b2_ref[...], (B, 4 * H))
    w_attn = jnp.broadcast_to(w_attn_ref[...], (B, H))
    b_attn = b_attn_ref[0, 0]
    t_lane = lax.broadcasted_iota(jnp.int32, (B, T), 1)

    def step(t, carry):
        h1, h2, m, s, acc, res_acc, scores = carry

        gi1 = gi_ref[pl.ds(pl.multiple_of(t * B, B), B), :]         # (B, 4H)

        # --- GRU layer 1 (input-side gates precomputed in gi1[:, :3H]) ---
        gh1 = jnp.dot(h1, w_h1, preferred_element_type=f32)          # (B, 3H)
        r1 = jax.nn.sigmoid(gi1[:, 0:H] + gh1[:, 0:H])
        z1 = jax.nn.sigmoid(gi1[:, H:2 * H] + gh1[:, H:2 * H])
        n1 = jnp.tanh(gi1[:, 2 * H:3 * H] + r1 * (gh1[:, 2 * H:3 * H] + b_hn1))
        h1n = (1.0 - z1) * n1 + z1 * h1

        # --- GRU layer 2: input + recurrent gates in ONE fused matmul ---
        # TODO(synk): inter-layer GRU dropout (p=0.1) is a no-op in eval mode.
        g2 = jnp.dot(jnp.concatenate([h1n, h2], axis=1), w2,
                     preferred_element_type=f32) + b2               # (B, 4H)
        r2 = jax.nn.sigmoid(g2[:, 0:H])
        z2 = jax.nn.sigmoid(g2[:, H:2 * H])
        n2 = jnp.tanh(g2[:, 2 * H:3 * H] + r2 * g2[:, 3 * H:4 * H])
        h2n = (1.0 - z2) * n2 + z2 * h2

        # --- attention score + online softmax accumulation ---
        score = jnp.sum(h2n * w_attn, axis=-1, keepdims=True) + b_attn  # (B, 1)
        scores_new = jnp.where(t_lane == t, score, scores)              # (B, T)
        m_new = jnp.maximum(m, score)
        alpha = jnp.exp(m - m_new)
        p = jnp.exp(score - m_new)
        s_new = alpha * s + p
        acc_new = alpha * acc + p * h2n

        # --- residual accumulation: sum_t (x_t @ Wres + bres) ---
        res_new = res_acc + gi1[:, 3 * H:4 * H]

        return h1n, h2n, m_new, s_new, acc_new, res_new, scores_new

    init = (
        jnp.zeros((B, H), f32),            # h1
        jnp.zeros((B, H), f32),            # h2
        jnp.full((B, 1), -1e30, f32),      # running max
        jnp.zeros((B, 1), f32),            # running softmax denom
        jnp.zeros((B, H), f32),            # weighted-h2 accumulator
        jnp.zeros((B, H), f32),            # residual accumulator
        jnp.zeros((B, T), f32),            # raw attention scores
    )
    _, _, m, s, acc, res_acc, scores = lax.fori_loop(0, T, step, init,
                                                     unroll=True)

    inv_s = pl.reciprocal(s, approx=True)                            # (B, 1)

    # --- attention weights output: softmax over time (single lane-dense store)
    attn_ref[...] = jnp.exp(scores - m) * inv_s

    # --- context + residual (residual = mean_t(x_t) @ Wres + bres) ---
    context = acc * inv_s + res_acc * (1.0 / T)                      # (B, H)

    # --- LayerNorm over hidden (eps = 1e-5, nn.LayerNorm default) ---
    mu = jnp.mean(context, axis=-1, keepdims=True)
    var = jnp.mean((context - mu) ** 2, axis=-1, keepdims=True)
    context = (context - mu) * lax.rsqrt(var + 1e-5) * gamma_ref[...] + beta_ref[...]

    # --- SiLU (final dropout is identity in eval mode) ---
    context = context * jax.nn.sigmoid(context)

    # --- classifier head ---
    logits_ref[...] = (
        jnp.dot(context, w_fc_ref[...], preferred_element_type=f32) + b_fc_ref[...]
    )


# ---------------------------------------------------------------------------
# Parameters (deterministic synthetic init, PyTorch-default-style uniform)
# ---------------------------------------------------------------------------
def make_params(input_size, hidden_size, num_classes, seed=0):
    key = jax.random.PRNGKey(seed)
    keys = iter(jax.random.split(key, 64))

    def u(shape, scale):
        return jax.random.uniform(next(keys), shape, jnp.float32, -scale, scale)

    F, H, C = input_size, hidden_size, num_classes
    kH = 1.0 / (H ** 0.5)
    kF = 1.0 / (F ** 0.5)
    p = {}
    for layer, f_in in (('1', F), ('2', H)):
        p['wir' + layer] = u((f_in, H), kH)
        p['wiz' + layer] = u((f_in, H), kH)
        p['win' + layer] = u((f_in, H), kH)
        p['whr' + layer] = u((H, H), kH)
        p['whz' + layer] = u((H, H), kH)
        p['whn' + layer] = u((H, H), kH)
        for b in ('bir', 'biz', 'bin', 'bhr', 'bhz', 'bhn'):
            p[b + layer] = u((1, H), kH)
    p['wattn'] = u((1, H), kH)          # Linear(H, 1) weight, stored (1, H)
    p['battn'] = u((1, 1), kH)
    p['wres'] = u((F, H), kF)           # Linear(F, H), pre-transposed
    p['bres'] = u((1, H), kF)
    p['gamma'] = jnp.ones((1, H), jnp.float32)
    p['beta'] = jnp.zeros((1, H), jnp.float32)
    p['wfc'] = u((H, C), kH)            # Linear(H, C), pre-transposed
    p['bfc'] = u((1, C), kH)
    return p


def pack_params(p):
    """Host-side fusion of per-gate weights/biases into the kernel layout."""
    H = p['whr1'].shape[0]
    zH = jnp.zeros((H, H), jnp.float32)
    return {
        'w_in1': jnp.concatenate([p['wir1'], p['wiz1'], p['win1'], p['wres']], axis=1),
        'b_in1': jnp.concatenate([p['bir1'] + p['bhr1'],
                                  p['biz1'] + p['bhz1'],
                                  p['bin1'], p['bres']], axis=1),
        'w_h1': jnp.concatenate([p['whr1'], p['whz1'], p['whn1']], axis=1),
        'b_hn1': p['bhn1'],
        'w_2': jnp.concatenate([
            jnp.concatenate([p['wir2'], p['wiz2'], p['win2'], zH], axis=1),
            jnp.concatenate([p['whr2'], p['whz2'], zH, p['whn2']], axis=1),
        ], axis=0),
        'b_2': jnp.concatenate([p['bir2'] + p['bhr2'],
                                p['biz2'] + p['bhz2'],
                                p['bin2'], p['bhn2']], axis=1),
        'w_attn': p['wattn'],
        'b_attn': p['battn'],
        'gamma': p['gamma'],
        'beta': p['beta'],
        'w_fc': p['wfc'],
        'b_fc': p['bfc'],
    }


_PACKED_ORDER = ('w_in1', 'b_in1', 'w_h1', 'b_hn1', 'w_2', 'b_2',
                 'w_attn', 'b_attn', 'gamma', 'beta', 'w_fc', 'b_fc')


# ---------------------------------------------------------------------------
# Wrapper
# ---------------------------------------------------------------------------
def _vmem_spec():
    return pl.BlockSpec(memory_space=pltpu.MemorySpace.VMEM)


def _smem_spec():
    return pl.BlockSpec(memory_space=pltpu.MemorySpace.SMEM)


@jax.jit
def forward(x_btf, packed):
    B, T, F = x_btf.shape
    H = packed['w_h1'].shape[0]
    C = packed['w_fc'].shape[1]

    # time-major, row-flattened: row t*B + b  <->  (t, b)
    x_flat = jnp.transpose(x_btf, (1, 0, 2)).reshape(T * B, F).astype(jnp.float32)

    flops = (2 * T * B * F * 4 * H                      # hoisted input proj + residual
             + T * (2 * B * H * 3 * H                   # layer-1 recurrent matmul
                    + 2 * B * 2 * H * 4 * H)            # fused layer-2 matmul
             + 2 * B * H * C)                           # classifier head
    transcendentals = T * B * (6 * H + 2) + 3 * B * H
    bytes_accessed = 4 * (x_flat.size
                          + sum(int(v.size) for v in packed.values())
                          + B * C + B * T)

    inputs = [x_flat] + [packed[k] for k in _PACKED_ORDER]
    in_specs = [_vmem_spec() for _ in inputs]
    in_specs[1 + _PACKED_ORDER.index('b_attn')] = _smem_spec()   # (1,1) scalar -> SMEM

    logits, attn_bt = pl.pallas_call(
        aki_gru_attn_kernel,
        out_shape=(jax.ShapeDtypeStruct((B, C), jnp.float32),
                   jax.ShapeDtypeStruct((B, T), jnp.float32)),
        in_specs=in_specs,
        out_specs=(_vmem_spec(), _vmem_spec()),
        scratch_shapes=[pltpu.VMEM((T * B, 4 * H), jnp.float32)],
        compiler_params=pltpu.CompilerParams(vmem_limit_bytes=32 * 1024 * 1024),
        cost_estimate=pl.CostEstimate(flops=flops,
                                      transcendentals=transcendentals,
                                      bytes_accessed=bytes_accessed),
    )(*inputs)

    return logits, attn_bt[:, :, None]                  # (B, C), (B, T, 1)


# ---------------------------------------------------------------------------
# Pure-JAX reference (operates on the raw, unfused params)
# ---------------------------------------------------------------------------
def ref_forward(x_btf, p):
    x = jnp.transpose(x_btf, (1, 0, 2)).astype(jnp.float32)       # (T, B, F)
    B = x.shape[1]
    H = p['wir1'].shape[1]

    def run_layer(seq, sfx):
        def step(h, x_t):
            r = jax.nn.sigmoid(x_t @ p['wir' + sfx] + p['bir' + sfx]
                               + h @ p['whr' + sfx] + p['bhr' + sfx])
            z = jax.nn.sigmoid(x_t @ p['wiz' + sfx] + p['biz' + sfx]
                               + h @ p['whz' + sfx] + p['bhz' + sfx])
            n = jnp.tanh(x_t @ p['win' + sfx] + p['bin' + sfx]
                         + r * (h @ p['whn' + sfx] + p['bhn' + sfx]))
            h_new = (1.0 - z) * n + z * h
            return h_new, h_new
        _, outs = lax.scan(step, jnp.zeros((B, H), jnp.float32), seq)
        return outs

    r1 = run_layer(x, '1')
    r2 = run_layer(r1, '2')
    scores = jnp.sum(r2 * p['wattn'][None, :, :], axis=-1) + p['battn']
    w = jax.nn.softmax(scores, axis=0)
    context = jnp.sum(w[:, :, None] * r2, axis=0)
    context = context + x.mean(axis=0) @ p['wres'] + p['bres']
    mu = context.mean(-1, keepdims=True)
    var = ((context - mu) ** 2).mean(-1, keepdims=True)
    context = (context - mu) / jnp.sqrt(var + 1e-5) * p['gamma'] + p['beta']
    context = context * jax.nn.sigmoid(context)
    logits = context @ p['wfc'] + p['bfc']
    return logits, jnp.transpose(w)[:, :, None]


# ---------------------------------------------------------------------------
if __name__ == "__main__":
    B, T, F, H, C = 2, 8, 16, 32, 2     # batch, seq, input_size, hidden, classes
    raw = make_params(F, H, C, seed=0)
    packed = pack_params(raw)
    x = jax.random.normal(jax.random.PRNGKey(0), (B, T, F), jnp.float32)

    logits, attn = forward(x, packed)
    logits, attn = jax.block_until_ready((logits, attn))

    ref_logits, ref_attn = ref_forward(x, raw)
    assert logits.shape == (B, C), logits.shape
    assert attn.shape == (B, T, 1), attn.shape
    assert jnp.allclose(logits, ref_logits, rtol=5e-2, atol=2e-2), (logits, ref_logits)
    assert jnp.allclose(attn, ref_attn, rtol=5e-2, atol=2e-2), (attn, ref_attn)

    print("KERNEL_OK")
</pallas_src>

<mosaic_0001>
module attributes {stable_mosaic.version = 11 : i64} {
  func.func @aki_gru_attn_kernel(%arg0: memref<16x16xf32, #tpu.memory_space<vmem>>, %arg1: memref<16x128xf32, #tpu.memory_space<vmem>>, %arg2: memref<1x128xf32, #tpu.memory_space<vmem>>, %arg3: memref<32x96xf32, #tpu.memory_space<vmem>>, %arg4: memref<1x32xf32, #tpu.memory_space<vmem>>, %arg5: memref<64x128xf32, #tpu.memory_space<vmem>>, %arg6: memref<1x128xf32, #tpu.memory_space<vmem>>, %arg7: memref<1x32xf32, #tpu.memory_space<vmem>>, %arg8: memref<1x1xf32, #tpu.memory_space<smem>>, %arg9: memref<1x32xf32, #tpu.memory_space<vmem>>, %arg10: memref<1x32xf32, #tpu.memory_space<vmem>>, %arg11: memref<32x2xf32, #tpu.memory_space<vmem>>, %arg12: memref<1x2xf32, #tpu.memory_space<vmem>>, %arg13: memref<2x2xf32, #tpu.memory_space<vmem>>, %arg14: memref<2x8xf32, #tpu.memory_space<vmem>>, %arg15: memref<16x128xf32, #tpu.memory_space<vmem>>) attributes {dimension_semantics = [], scalar_prefetch = 0 : i64, scratch_operands = 1 : i64, tpu.core_type = #tpu.core_type<tc>} {
    %c0 = arith.constant 0 : index
    %c0_0 = arith.constant 0 : index
    %0 = vector.load %arg0[%c0, %c0_0] : memref<16x16xf32, #tpu.memory_space<vmem>>, vector<16x16xf32>
    %c0_1 = arith.constant 0 : index
    %c0_2 = arith.constant 0 : index
    %1 = vector.load %arg1[%c0_1, %c0_2] : memref<16x128xf32, #tpu.memory_space<vmem>>, vector<16x128xf32>
    %cst = arith.constant dense<0.000000e+00> : vector<16x128xf32>
    %2 = tpu.matmul %0, %1, %cst {dimension_numbers = #tpu.dot_dimension_numbers<[1], [0], [0], [1], [0, 0, 1, 1], [], []>} : vector<16x16xf32>, vector<16x128xf32>, vector<16x128xf32> -> vector<16x128xf32>
    %c0_3 = arith.constant 0 : index
    %c0_4 = arith.constant 0 : index
    %3 = vector.load %arg2[%c0_3, %c0_4] : memref<1x128xf32, #tpu.memory_space<vmem>>, vector<1x128xf32>
    %4 = vector.broadcast %3 : vector<1x128xf32> to vector<16x128xf32>
    %5 = arith.addf %2, %4 : vector<16x128xf32>
    %c0_5 = arith.constant 0 : index
    %c0_6 = arith.constant 0 : index
    %6 = vector.load %arg15[%c0_5, %c0_6] : memref<16x128xf32, #tpu.memory_space<vmem>>, vector<16x128xf32>
    tpu.vector_store %arg15[%c0_5, %c0_6], %5 {strides = array<i32>} : memref<16x128xf32, #tpu.memory_space<vmem>>, vector<16x128xf32>,
    %c0_7 = arith.constant 0 : index
    %c0_8 = arith.constant 0 : index
    %7 = vector.load %arg3[%c0_7, %c0_8] : memref<32x96xf32, #tpu.memory_space<vmem>>, vector<32x96xf32>
    %c0_9 = arith.constant 0 : index
    %c0_10 = arith.constant 0 : index
    %8 = vector.load %arg5[%c0_9, %c0_10] : memref<64x128xf32, #tpu.memory_space<vmem>>, vector<64x128xf32>
    %c0_11 = arith.constant 0 : index
    %c0_12 = arith.constant 0 : index
    %9 = vector.load %arg4[%c0_11, %c0_12] : memref<1x32xf32, #tpu.memory_space<vmem>>, vector<1x32xf32>
    %10 = vector.shape_cast %9 : vector<1x32xf32> to vector<1x32xf32>
    %11 = vector.broadcast %10 : vector<1x32xf32> to vector<2x32xf32>
    %c0_13 = arith.constant 0 : index
    %c0_14 = arith.constant 0 : index
    %12 = vector.load %arg6[%c0_13, %c0_14] : memref<1x128xf32, #tpu.memory_space<vmem>>, vector<1x128xf32>
    %13 = vector.shape_cast %12 : vector<1x128xf32> to vector<1x128xf32>
    %14 = vector.broadcast %13 : vector<1x128xf32> to vector<2x128xf32>
    %c0_15 = arith.constant 0 : index
    %c0_16 = arith.constant 0 : index
    %15 = vector.load %arg7[%c0_15, %c0_16] : memref<1x32xf32, #tpu.memory_space<vmem>>, vector<1x32xf32>
    %16 = vector.shape_cast %15 : vector<1x32xf32> to vector<1x32xf32>
    %17 = vector.broadcast %16 : vector<1x32xf32> to vector<2x32xf32>
    %c0_17 = arith.constant 0 : index
    %c0_18 = arith.constant 0 : index
    %18 = memref.load %arg8[%c0_17, %c0_18] : memref<1x1xf32, #tpu.memory_space<smem>>
    %19 = tpu.iota {dimensions = array<i32: 1>} : vector<2x8xi32>
    %cst_19 = arith.constant 0.000000e+00 : f32
    %20 = vector.broadcast %cst_19 : f32 to vector<2x32xf32>
    %cst_20 = arith.constant 0.000000e+00 : f32
    %21 = vector.broadcast %cst_20 : f32 to vector<2x32xf32>
    %cst_21 = arith.constant -1.000000e+30 : f32
    %22 = vector.broadcast %cst_21 : f32 to vector<2x1xf32>
    %cst_22 = arith.constant 0.000000e+00 : f32
    %23 = vector.broadcast %cst_22 : f32 to vector<2x1xf32>
    %cst_23 = arith.constant 0.000000e+00 : f32
    %24 = vector.broadcast %cst_23 : f32 to vector<2x32xf32>
    %cst_24 = arith.constant 0.000000e+00 : f32
    %25 = vector.broadcast %cst_24 : f32 to vector<2x32xf32>
    %cst_25 = arith.constant 0.000000e+00 : f32
    %26 = vector.broadcast %cst_25 : f32 to vector<2x8xf32>
    %c0_i32 = arith.constant 0 : i32
    %c2_i32 = arith.constant 2 : i32
    %27 = arith.muli %c0_i32, %c2_i32 : i32
    %28 = tpu.assume_multiple %27, 2 : i32
    %29 = arith.index_cast %28 : i32 to index
    %c0_26 = arith.constant 0 : index
    %30 = vector.load %arg15[%29, %c0_26] : memref<16x128xf32, #tpu.memory_space<vmem>>, vector<2x128xf32>
    %cst_27 = arith.constant dense<0.000000e+00> : vector<2x96xf32>
    %31 = tpu.matmul %20, %7, %cst_27 {dimension_numbers = #tpu.dot_dimension_numbers<[1], [0], [0], [1], [0, 0, 1, 1], [], []>} : vector<2x32xf32>, vector<32x96xf32>, vector<2x96xf32> -> vector<2x96xf32>
    %32 = vector.extract_strided_slice %30 {offsets = [0, 0], sizes = [2, 32], strides = [1, 1]} : vector<2x128xf32> to vector<2x32xf32>
    %33 = vector.extract_strided_slice %31 {offsets = [0, 0], sizes = [2, 32], strides = [1, 1]} : vector<2x96xf32> to vector<2x32xf32>
    %34 = arith.addf %32, %33 : vector<2x32xf32>
    %35 = arith.negf %34 : vector<2x32xf32>
    %36 = math.exp %35 : vector<2x32xf32>
    %cst_28 = arith.constant 1.000000e+00 : f32
    %37 = vector.broadcast %cst_28 : f32 to vector<2x32xf32>
    %38 = arith.addf %37, %36 : vector<2x32xf32>
    %39 = arith.divf %37, %38 : vector<2x32xf32>
    %40 = vector.extract_strided_slice %30 {offsets = [0, 32], sizes = [2, 32], strides = [1, 1]} : vector<2x128xf32> to vector<2x32xf32>
    %41 = vector.extract_strided_slice %31 {offsets = [0, 32], sizes = [2, 32], strides = [1, 1]} : vector<2x96xf32> to vector<2x32xf32>
    %42 = arith.addf %40, %41 : vector<2x32xf32>
    %43 = arith.negf %42 : vector<2x32xf32>
    %44 = math.exp %43 : vector<2x32xf32>
    %cst_29 = arith.constant 1.000000e+00 : f32
    %45 = vector.broadcast %cst_29 : f32 to vector<2x32xf32>
    %46 = arith.addf %45, %44 : vector<2x32xf32>
    %47 = arith.divf %45, %46 : vector<2x32xf32>
    %48 = vector.extract_strided_slice %30 {offsets = [0, 64], sizes = [2, 32], strides = [1, 1]} : vector<2x128xf32> to vector<2x32xf32>
    %49 = vector.extract_strided_slice %31 {offsets = [0, 64], sizes = [2, 32], strides = [1, 1]} : vector<2x96xf32> to vector<2x32xf32>
    %50 = arith.addf %49, %11 : vector<2x32xf32>
    %51 = arith.mulf %39, %50 : vector<2x32xf32>
    %52 = arith.addf %48, %51 : vector<2x32xf32>
    %53 = math.tanh %52 : vector<2x32xf32>
    %cst_30 = arith.constant 1.000000e+00 : f32
    %54 = vector.broadcast %cst_30 : f32 to vector<2x32xf32>
    %55 = arith.subf %54, %47 : vector<2x32xf32>
    %56 = arith.mulf %55, %53 : vector<2x32xf32>
    %57 = arith.mulf %47, %20 : vector<2x32xf32>
    %58 = arith.addf %56, %57 : vector<2x32xf32>
    %59 = tpu.concatenate %58, %21 in 1 : vector<2x32xf32>, vector<2x32xf32> -> vector<2x64xf32>
    %cst_31 = arith.constant dense<0.000000e+00> : vector<2x128xf32>
    %60 = tpu.matmul %59, %8, %cst_31 {dimension_numbers = #tpu.dot_dimension_numbers<[1], [0], [0], [1], [0, 0, 1, 1], [], []>} : vector<2x64xf32>, vector<64x128xf32>, vector<2x128xf32> -> vector<2x128xf32>
    %61 = arith.addf %60, %14 : vector<2x128xf32>
    %62 = vector.extract_strided_slice %61 {offsets = [0, 0], sizes = [2, 32], strides = [1, 1]} : vector<2x128xf32> to vector<2x32xf32>
    %63 = arith.negf %62 : vector<2x32xf32>
    %64 = math.exp %63 : vector<2x32xf32>
    %cst_32 = arith.constant 1.000000e+00 : f32
    %65 = vector.broadcast %cst_32 : f32 to vector<2x32xf32>
    %66 = arith.addf %65, %64 : vector<2x32xf32>
    %67 = arith.divf %65, %66 : vector<2x32xf32>
    %68 = vector.extract_strided_slice %61 {offsets = [0, 32], sizes = [2, 32], strides = [1, 1]} : vector<2x128xf32> to vector<2x32xf32>
    %69 = arith.negf %68 : vector<2x32xf32>
    %70 = math.exp %69 : vector<2x32xf32>
    %cst_33 = arith.constant 1.000000e+00 : f32
    %71 = vector.broadcast %cst_33 : f32 to vector<2x32xf32>
    %72 = arith.addf %71, %70 : vector<2x32xf32>
    %73 = arith.divf %71, %72 : vector<2x32xf32>
    %74 = vector.extract_strided_slice %61 {offsets = [0, 64], sizes = [2, 32], strides = [1, 1]} : vector<2x128xf32> to vector<2x32xf32>
    %75 = vector.extract_strided_slice %61 {offsets = [0, 96], sizes = [2, 32], strides = [1, 1]} : vector<2x128xf32> to vector<2x32xf32>
    %76 = arith.mulf %67, %75 : vector<2x32xf32>
    %77 = arith.addf %74, %76 : vector<2x32xf32>
    %78 = math.tanh %77 : vector<2x32xf32>
    %cst_34 = arith.constant 1.000000e+00 : f32
    %79 = vector.broadcast %cst_34 : f32 to vector<2x32xf32>
    %80 = arith.subf %79, %73 : vector<2x32xf32>
    %81 = arith.mulf %80, %78 : vector<2x32xf32>
    %82 = arith.mulf %73, %21 : vector<2x32xf32>
    %83 = arith.addf %81, %82 : vector<2x32xf32>
    %84 = arith.mulf %83, %17 : vector<2x32xf32>
    %cst_35 = arith.constant dense<0.000000e+00> : vector<2xf32>
    %85 = vector.multi_reduction <add>, %84, %cst_35 [1] : vector<2x32xf32> to vector<2xf32>
    %86 = vector.shape_cast %85 : vector<2xf32> to vector<2x1xf32>
    %87 = vector.broadcast %18 : f32 to vector<2x1xf32>
    %88 = arith.addf %86, %87 : vector<2x1xf32>
    %89 = vector.broadcast %c0_i32 : i32 to vector<2x8xi32>
    %90 = arith.cmpi eq, %19, %89 : vector<2x8xi32>
    %91 = vector.shape_cast %88 : vector<2x1xf32> to vector<2x1xf32>
    %92 = vector.broadcast %91 : vector<2x1xf32> to vector<2x8xf32>
    %93 = arith.select %90, %92, %26 : vector<2x8xi1>, vector<2x8xf32>
    %94 = arith.maximumf %22, %88 : vector<2x1xf32>
    %95 = arith.subf %22, %94 : vector<2x1xf32>
    %96 = math.exp %95 : vector<2x1xf32>
    %97 = arith.subf %88, %94 : vector<2x1xf32>
    %98 = math.exp %97 : vector<2x1xf32>
    %99 = arith.mulf %96, %23 : vector<2x1xf32>
    %100 = arith.addf %99, %98 : vector<2x1xf32>
    %101 = vector.broadcast %96 : vector<2x1xf32> to vector<2x32xf32>
    %102 = arith.mulf %101, %24 : vector<2x32xf32>
    %103 = vector.broadcast %98 : vector<2x1xf32> to vector<2x32xf32>
    %104 = arith.mulf %103, %83 : vector<2x32xf32>
    %105 = arith.addf %102, %104 : vector<2x32xf32>
    %106 = vector.extract_strided_slice %30 {offsets = [0, 96], sizes = [2, 32], strides = [1, 1]} : vector<2x128xf32> to vector<2x32xf32>
    %107 = arith.addf %25, %106 : vector<2x32xf32>
    %c1_i32 = arith.constant 1 : i32
    %c2_i32_36 = arith.constant 2 : i32
    %108 = arith.muli %c1_i32, %c2_i32_36 : i32
    %109 = tpu.assume_multiple %108, 2 : i32
    %110 = arith.index_cast %109 : i32 to index
    %c0_37 = arith.constant 0 : index
    %111 = vector.load %arg15[%110, %c0_37] : memref<16x128xf32, #tpu.memory_space<vmem>>, vector<2x128xf32>
    %cst_38 = arith.constant dense<0.000000e+00> : vector<2x96xf32>
    %112 = tpu.matmul %58, %7, %cst_38 {dimension_numbers = #tpu.dot_dimension_numbers<[1], [0], [0], [1], [0, 0, 1, 1], [], []>} : vector<2x32xf32>, vector<32x96xf32>, vector<2x96xf32> -> vector<2x96xf32>
    %113 = vector.extract_strided_slice %111 {offsets = [0, 0], sizes = [2, 32], strides = [1, 1]} : vector<2x128xf32> to vector<2x32xf32>
    %114 = vector.extract_strided_slice %112 {offsets = [0, 0], sizes = [2, 32], strides = [1, 1]} : vector<2x96xf32> to vector<2x32xf32>
    %115 = arith.addf %113, %114 : vector<2x32xf32>
    %116 = arith.negf %115 : vector<2x32xf32>
    %117 = math.exp %116 : vector<2x32xf32>
    %cst_39 = arith.constant 1.000000e+00 : f32
    %118 = vector.broadcast %cst_39 : f32 to vector<2x32xf32>
    %119 = arith.addf %118, %117 : vector<2x32xf32>
    %120 = arith.divf %118, %119 : vector<2x32xf32>
    %121 = vector.extract_strided_slice %111 {offsets = [0, 32], sizes = [2, 32], strides = [1, 1]} : vector<2x128xf32> to vector<2x32xf32>
    %122 = vector.extract_strided_slice %112 {offsets = [0, 32], sizes = [2, 32], strides = [1, 1]} : vector<2x96xf32> to vector<2x32xf32>
    %123 = arith.addf %121, %122 : vector<2x32xf32>
    %124 = arith.negf %123 : vector<2x32xf32>
    %125 = math.exp %124 : vector<2x32xf32>
    %cst_40 = arith.constant 1.000000e+00 : f32
    %126 = vector.broadcast %cst_40 : f32 to vector<2x32xf32>
    %127 = arith.addf %126, %125 : vector<2x32xf32>
    %128 = arith.divf %126, %127 : vector<2x32xf32>
    %129 = vector.extract_strided_slice %111 {offsets = [0, 64], sizes = [2, 32], strides = [1, 1]} : vector<2x128xf32> to vector<2x32xf32>
    %130 = vector.extract_strided_slice %112 {offsets = [0, 64], sizes = [2, 32], strides = [1, 1]} : vector<2x96xf32> to vector<2x32xf32>
    %131 = arith.addf %130, %11 : vector<2x32xf32>
    %132 = arith.mulf %120, %131 : vector<2x32xf32>
    %133 = arith.addf %129, %132 : vector<2x32xf32>
    %134 = math.tanh %133 : vector<2x32xf32>
    %cst_41 = arith.constant 1.000000e+00 : f32
    %135 = vector.broadcast %cst_41 : f32 to vector<2x32xf32>
    %136 = arith.subf %135, %128 : vector<2x32xf32>
    %137 = arith.mulf %136, %134 : vector<2x32xf32>
    %138 = arith.mulf %128, %58 : vector<2x32xf32>
    %139 = arith.addf %137, %138 : vector<2x32xf32>
    %140 = tpu.concatenate %139, %83 in 1 : vector<2x32xf32>, vector<2x32xf32> -> vector<2x64xf32>
    %cst_42 = arith.constant dense<0.000000e+00> : vector<2x128xf32>
    %141 = tpu.matmul %140, %8, %cst_42 {dimension_numbers = #tpu.dot_dimension_numbers<[1], [0], [0], [1], [0, 0, 1, 1], [], []>} : vector<2x64xf32>, vector<64x128xf32>, vector<2x128xf32> -> vector<2x128xf32>
    %142 = arith.addf %141, %14 : vector<2x128xf32>
    %143 = vector.extract_strided_slice %142 {offsets = [0, 0], sizes = [2, 32], strides = [1, 1]} : vector<2x128xf32> to vector<2x32xf32>
    %144 = arith.negf %143 : vector<2x32xf32>
    %145 = math.exp %144 : vector<2x32xf32>
    %cst_43 = arith.constant 1.000000e+00 : f32
    %146 = vector.broadcast %cst_43 : f32 to vector<2x32xf32>
    %147 = arith.addf %146, %145 : vector<2x32xf32>
    %148 = arith.divf %146, %147 : vector<2x32xf32>
    %149 = vector.extract_strided_slice %142 {offsets = [0, 32], sizes = [2, 32], strides = [1, 1]} : vector<2x128xf32> to vector<2x32xf32>
    %150 = arith.negf %149 : vector<2x32xf32>
    %151 = math.exp %150 : vector<2x32xf32>
    %cst_44 = arith.constant 1.000000e+00 : f32
    %152 = vector.broadcast %cst_44 : f32 to vector<2x32xf32>
    %153 = arith.addf %152, %151 : vector<2x32xf32>
    %154 = arith.divf %152, %153 : vector<2x32xf32>
    %155 = vector.extract_strided_slice %142 {offsets = [0, 64], sizes = [2, 32], strides = [1, 1]} : vector<2x128xf32> to vector<2x32xf32>
    %156 = vector.extract_strided_slice %142 {offsets = [0, 96], sizes = [2, 32], strides = [1, 1]} : vector<2x128xf32> to vector<2x32xf32>
    %157 = arith.mulf %148, %156 : vector<2x32xf32>
    %158 = arith.addf %155, %157 : vector<2x32xf32>
    %159 = math.tanh %158 : vector<2x32xf32>
    %cst_45 = arith.constant 1.000000e+00 : f32
    %160 = vector.broadcast %cst_45 : f32 to vector<2x32xf32>
    %161 = arith.subf %160, %154 : vector<2x32xf32>
    %162 = arith.mulf %161, %159 : vector<2x32xf32>
    %163 = arith.mulf %154, %83 : vector<2x32xf32>
    %164 = arith.addf %162, %163 : vector<2x32xf32>
    %165 = arith.mulf %164, %17 : vector<2x32xf32>
    %cst_46 = arith.constant dense<0.000000e+00> : vector<2xf32>
    %166 = vector.multi_reduction <add>, %165, %cst_46 [1] : vector<2x32xf32> to vector<2xf32>
    %167 = vector.shape_cast %166 : vector<2xf32> to vector<2x1xf32>
    %168 = vector.broadcast %18 : f32 to vector<2x1xf32>
    %169 = arith.addf %167, %168 : vector<2x1xf32>
    %170 = vector.broadcast %c1_i32 : i32 to vector<2x8xi32>
    %171 = arith.cmpi eq, %19, %170 : vector<2x8xi32>
    %172 = vector.shape_cast %169 : vector<2x1xf32> to vector<2x1xf32>
    %173 = vector.broadcast %172 : vector<2x1xf32> to vector<2x8xf32>
    %174 = arith.select %171, %173, %93 : vector<2x8xi1>, vector<2x8xf32>
    %175 = arith.maximumf %94, %169 : vector<2x1xf32>
    %176 = arith.subf %94, %175 : vector<2x1xf32>
    %177 = math.exp %176 : vector<2x1xf32>
    %178 = arith.subf %169, %175 : vector<2x1xf32>
    %179 = math.exp %178 : vector<2x1xf32>
    %180 = arith.mulf %177, %100 : vector<2x1xf32>
    %181 = arith.addf %180, %179 : vector<2x1xf32>
    %182 = vector.broadcast %177 : vector<2x1xf32> to vector<2x32xf32>
    %183 = arith.mulf %182, %105 : vector<2x32xf32>
    %184 = vector.broadcast %179 : vector<2x1xf32> to vector<2x32xf32>
    %185 = arith.mulf %184, %164 : vector<2x32xf32>
    %186 = arith.addf %183, %185 : vector<2x32xf32>
    %187 = vector.extract_strided_slice %111 {offsets = [0, 96], sizes = [2, 32], strides = [1, 1]} : vector<2x128xf32> to vector<2x32xf32>
    %188 = arith.addf %107, %187 : vector<2x32xf32>
    %c2_i32_47 = arith.constant 2 : i32
    %c2_i32_48 = arith.constant 2 : i32
    %189 = arith.muli %c2_i32_47, %c2_i32_48 : i32
    %190 = tpu.assume_multiple %189, 2 : i32
    %191 = arith.index_cast %190 : i32 to index
    %c0_49 = arith.constant 0 : index
    %192 = vector.load %arg15[%191, %c0_49] : memref<16x128xf32, #tpu.memory_space<vmem>>, vector<2x128xf32>
    %cst_50 = arith.constant dense<0.000000e+00> : vector<2x96xf32>
    %193 = tpu.matmul %139, %7, %cst_50 {dimension_numbers = #tpu.dot_dimension_numbers<[1], [0], [0], [1], [0, 0, 1, 1], [], []>} : vector<2x32xf32>, vector<32x96xf32>, vector<2x96xf32> -> vector<2x96xf32>
    %194 = vector.extract_strided_slice %192 {offsets = [0, 0], sizes = [2, 32], strides = [1, 1]} : vector<2x128xf32> to vector<2x32xf32>
    %195 = vector.extract_strided_slice %193 {offsets = [0, 0], sizes = [2, 32], strides = [1, 1]} : vector<2x96xf32> to vector<2x32xf32>
    %196 = arith.addf %194, %195 : vector<2x32xf32>
    %197 = arith.negf %196 : vector<2x32xf32>
    %198 = math.exp %197 : vector<2x32xf32>
    %cst_51 = arith.constant 1.000000e+00 : f32
    %199 = vector.broadcast %cst_51 : f32 to vector<2x32xf32>
    %200 = arith.addf %199, %198 : vector<2x32xf32>
    %201 = arith.divf %199, %200 : vector<2x32xf32>
    %202 = vector.extract_strided_slice %192 {offsets = [0, 32], sizes = [2, 32], strides = [1, 1]} : vector<2x128xf32> to vector<2x32xf32>
    %203 = vector.extract_strided_slice %193 {offsets = [0, 32], sizes = [2, 32], strides = [1, 1]} : vector<2x96xf32> to vector<2x32xf32>
    %204 = arith.addf %202, %203 : vector<2x32xf32>
    %205 = arith.negf %204 : vector<2x32xf32>
    %206 = math.exp %205 : vector<2x32xf32>
    %cst_52 = arith.constant 1.000000e+00 : f32
    %207 = vector.broadcast %cst_52 : f32 to vector<2x32xf32>
    %208 = arith.addf %207, %206 : vector<2x32xf32>
    %209 = arith.divf %207, %208 : vector<2x32xf32>
    %210 = vector.extract_strided_slice %192 {offsets = [0, 64], sizes = [2, 32], strides = [1, 1]} : vector<2x128xf32> to vector<2x32xf32>
    %211 = vector.extract_strided_slice %193 {offsets = [0, 64], sizes = [2, 32], strides = [1, 1]} : vector<2x96xf32> to vector<2x32xf32>
    %212 = arith.addf %211, %11 : vector<2x32xf32>
    %213 = arith.mulf %201, %212 : vector<2x32xf32>
    %214 = arith.addf %210, %213 : vector<2x32xf32>
    %215 = math.tanh %214 : vector<2x32xf32>
    %cst_53 = arith.constant 1.000000e+00 : f32
    %216 = vector.broadcast %cst_53 : f32 to vector<2x32xf32>
    %217 = arith.subf %216, %209 : vector<2x32xf32>
    %218 = arith.mulf %217, %215 : vector<2x32xf32>
    %219 = arith.mulf %209, %139 : vector<2x32xf32>
    %220 = arith.addf %218, %219 : vector<2x32xf32>
    %221 = tpu.concatenate %220, %164 in 1 : vector<2x32xf32>, vector<2x32xf32> -> vector<2x64xf32>
    %cst_54 = arith.constant dense<0.000000e+00> : vector<2x128xf32>
    %222 = tpu.matmul %221, %8, %cst_54 {dimension_numbers = #tpu.dot_dimension_numbers<[1], [0], [0], [1], [0, 0, 1, 1], [], []>} : vector<2x64xf32>, vector<64x128xf32>, vector<2x128xf32> -> vector<2x128xf32>
    %223 = arith.addf %222, %14 : vector<2x128xf32>
    %224 = vector.extract_strided_slice %223 {offsets = [0, 0], sizes = [2, 32], strides = [1, 1]} : vector<2x128xf32> to vector<2x32xf32>
    %225 = arith.negf %224 : vector<2x32xf32>
    %226 = math.exp %225 : vector<2x32xf32>
    %cst_55 = arith.constant 1.000000e+00 : f32
    %227 = vector.broadcast %cst_55 : f32 to vector<2x32xf32>
    %228 = arith.addf %227, %226 : vector<2x32xf32>
    %229 = arith.divf %227, %228 : vector<2x32xf32>
    %230 = vector.extract_strided_slice %223 {offsets = [0, 32], sizes = [2, 32], strides = [1, 1]} : vector<2x128xf32> to vector<2x32xf32>
    %231 = arith.negf %230 : vector<2x32xf32>
    %232 = math.exp %231 : vector<2x32xf32>
    %cst_56 = arith.constant 1.000000e+00 : f32
    %233 = vector.broadcast %cst_56 : f32 to vector<2x32xf32>
    %234 = arith.addf %233, %232 : vector<2x32xf32>
    %235 = arith.divf %233, %234 : vector<2x32xf32>
    %236 = vector.extract_strided_slice %223 {offsets = [0, 64], sizes = [2, 32], strides = [1, 1]} : vector<2x128xf32> to vector<2x32xf32>
    %237 = vector.extract_strided_slice %223 {offsets = [0, 96], sizes = [2, 32], strides = [1, 1]} : vector<2x128xf32> to vector<2x32xf32>
    %238 = arith.mulf %229, %237 : vector<2x32xf32>
    %239 = arith.addf %236, %238 : vector<2x32xf32>
    %240 = math.tanh %239 : vector<2x32xf32>
    %cst_57 = arith.constant 1.000000e+00 : f32
    %241 = vector.broadcast %cst_57 : f32 to vector<2x32xf32>
    %242 = arith.subf %241, %235 : vector<2x32xf32>
    %243 = arith.mulf %242, %240 : vector<2x32xf32>
    %244 = arith.mulf %235, %164 : vector<2x32xf32>
    %245 = arith.addf %243, %244 : vector<2x32xf32>
    %246 = arith.mulf %245, %17 : vector<2x32xf32>
    %cst_58 = arith.constant dense<0.000000e+00> : vector<2xf32>
    %247 = vector.multi_reduction <add>, %246, %cst_58 [1] : vector<2x32xf32> to vector<2xf32>
    %248 = vector.shape_cast %247 : vector<2xf32> to vector<2x1xf32>
    %249 = vector.broadcast %18 : f32 to vector<2x1xf32>
    %250 = arith.addf %248, %249 : vector<2x1xf32>
    %251 = vector.broadcast %c2_i32_47 : i32 to vector<2x8xi32>
    %252 = arith.cmpi eq, %19, %251 : vector<2x8xi32>
    %253 = vector.shape_cast %250 : vector<2x1xf32> to vector<2x1xf32>
    %254 = vector.broadcast %253 : vector<2x1xf32> to vector<2x8xf32>
    %255 = arith.select %252, %254, %174 : vector<2x8xi1>, vector<2x8xf32>
    %256 = arith.maximumf %175, %250 : vector<2x1xf32>
    %257 = arith.subf %175, %256 : vector<2x1xf32>
    %258 = math.exp %257 : vector<2x1xf32>
    %259 = arith.subf %250, %256 : vector<2x1xf32>
    %260 = math.exp %259 : vector<2x1xf32>
    %261 = arith.mulf %258, %181 : vector<2x1xf32>
    %262 = arith.addf %261, %260 : vector<2x1xf32>
    %263 = vector.broadcast %258 : vector<2x1xf32> to vector<2x32xf32>
    %264 = arith.mulf %263, %186 : vector<2x32xf32>
    %265 = vector.broadcast %260 : vector<2x1xf32> to vector<2x32xf32>
    %266 = arith.mulf %265, %245 : vector<2x32xf32>
    %267 = arith.addf %264, %266 : vector<2x32xf32>
    %268 = vector.extract_strided_slice %192 {offsets = [0, 96], sizes = [2, 32], strides = [1, 1]} : vector<2x128xf32> to vector<2x32xf32>
    %269 = arith.addf %188, %268 : vector<2x32xf32>
    %c3_i32 = arith.constant 3 : i32
    %c2_i32_59 = arith.constant 2 : i32
    %270 = arith.muli %c3_i32, %c2_i32_59 : i32
    %271 = tpu.assume_multiple %270, 2 : i32
    %272 = arith.index_cast %271 : i32 to index
    %c0_60 = arith.constant 0 : index
    %273 = vector.load %arg15[%272, %c0_60] : memref<16x128xf32, #tpu.memory_space<vmem>>, vector<2x128xf32>
    %cst_61 = arith.constant dense<0.000000e+00> : vector<2x96xf32>
    %274 = tpu.matmul %220, %7, %cst_61 {dimension_numbers = #tpu.dot_dimension_numbers<[1], [0], [0], [1], [0, 0, 1, 1], [], []>} : vector<2x32xf32>, vector<32x96xf32>, vector<2x96xf32> -> vector<2x96xf32>
    %275 = vector.extract_strided_slice %273 {offsets = [0, 0], sizes = [2, 32], strides = [1, 1]} : vector<2x128xf32> to vector<2x32xf32>
    %276 = vector.extract_strided_slice %274 {offsets = [0, 0], sizes = [2, 32], strides = [1, 1]} : vector<2x96xf32> to vector<2x32xf32>
    %277 = arith.addf %275, %276 : vector<2x32xf32>
    %278 = arith.negf %277 : vector<2x32xf32>
    %279 = math.exp %278 : vector<2x32xf32>
    %cst_62 = arith.constant 1.000000e+00 : f32
    %280 = vector.broadcast %cst_62 : f32 to vector<2x32xf32>
    %281 = arith.addf %280, %279 : vector<2x32xf32>
    %282 = arith.divf %280, %281 : vector<2x32xf32>
    %283 = vector.extract_strided_slice %273 {offsets = [0, 32], sizes = [2, 32], strides = [1, 1]} : vector<2x128xf32> to vector<2x32xf32>
    %284 = vector.extract_strided_slice %274 {offsets = [0, 32], sizes = [2, 32], strides = [1, 1]} : vector<2x96xf32> to vector<2x32xf32>
    %285 = arith.addf %283, %284 : vector<2x32xf32>
    %286 = arith.negf %285 : vector<2x32xf32>
    %287 = math.exp %286 : vector<2x32xf32>
    %cst_63 = arith.constant 1.000000e+00 : f32
    %288 = vector.broadcast %cst_63 : f32 to vector<2x32xf32>
    %289 = arith.addf %288, %287 : vector<2x32xf32>
    %290 = arith.divf %288, %289 : vector<2x32xf32>
    %291 = vector.extract_strided_slice %273 {offsets = [0, 64], sizes = [2, 32], strides = [1, 1]} : vector<2x128xf32> to vector<2x32xf32>
    %292 = vector.extract_strided_slice %274 {offsets = [0, 64], sizes = [2, 32], strides = [1, 1]} : vector<2x96xf32> to vector<2x32xf32>
    %293 = arith.addf %292, %11 : vector<2x32xf32>
    %294 = arith.mulf %282, %293 : vector<2x32xf32>
    %295 = arith.addf %291, %294 : vector<2x32xf32>
    %296 = math.tanh %295 : vector<2x32xf32>
    %cst_64 = arith.constant 1.000000e+00 : f32
    %297 = vector.broadcast %cst_64 : f32 to vector<2x32xf32>
    %298 = arith.subf %297, %290 : vector<2x32xf32>
    %299 = arith.mulf %298, %296 : vector<2x32xf32>
    %300 = arith.mulf %290, %220 : vector<2x32xf32>
    %301 = arith.addf %299, %300 : vector<2x32xf32>
    %302 = tpu.concatenate %301, %245 in 1 : vector<2x32xf32>, vector<2x32xf32> -> vector<2x64xf32>
    %cst_65 = arith.constant dense<0.000000e+00> : vector<2x128xf32>
    %303 = tpu.matmul %302, %8, %cst_65 {dimension_numbers = #tpu.dot_dimension_numbers<[1], [0], [0], [1], [0, 0, 1, 1], [], []>} : vector<2x64xf32>, vector<64x128xf32>, vector<2x128xf32> -> vector<2x128xf32>
    %304 = arith.addf %303, %14 : vector<2x128xf32>
    %305 = vector.extract_strided_slice %304 {offsets = [0, 0], sizes = [2, 32], strides = [1, 1]} : vector<2x128xf32> to vector<2x32xf32>
    %306 = arith.negf %305 : vector<2x32xf32>
    %307 = math.exp %306 : vector<2x32xf32>
    %cst_66 = arith.constant 1.000000e+00 : f32
    %308 = vector.broadcast %cst_66 : f32 to vector<2x32xf32>
    %309 = arith.addf %308, %307 : vector<2x32xf32>
    %310 = arith.divf %308, %309 : vector<2x32xf32>
    %311 = vector.extract_strided_slice %304 {offsets = [0, 32], sizes = [2, 32], strides = [1, 1]} : vector<2x128xf32> to vector<2x32xf32>
    %312 = arith.negf %311 : vector<2x32xf32>
    %313 = math.exp %312 : vector<2x32xf32>
    %cst_67 = arith.constant 1.000000e+00 : f32
    %314 = vector.broadcast %cst_67 : f32 to vector<2x32xf32>
    %315 = arith.addf %314, %313 : vector<2x32xf32>
    %316 = arith.divf %314, %315 : vector<2x32xf32>
    %317 = vector.extract_strided_slice %304 {offsets = [0, 64], sizes = [2, 32], strides = [1, 1]} : vector<2x128xf32> to vector<2x32xf32>
    %318 = vector.extract_strided_slice %304 {offsets = [0, 96], sizes = [2, 32], strides = [1, 1]} : vector<2x128xf32> to vector<2x32xf32>
    %319 = arith.mulf %310, %318 : vector<2x32xf32>
    %320 = arith.addf %317, %319 : vector<2x32xf32>
    %321 = math.tanh %320 : vector<2x32xf32>
    %cst_68 = arith.constant 1.000000e+00 : f32
    %322 = vector.broadcast %cst_68 : f32 to vector<2x32xf32>
    %323 = arith.subf %322, %316 : vector<2x32xf32>
    %324 = arith.mulf %323, %321 : vector<2x32xf32>
    %325 = arith.mulf %316, %245 : vector<2x32xf32>
    %326 = arith.addf %324, %325 : vector<2x32xf32>
    %327 = arith.mulf %326, %17 : vector<2x32xf32>
    %cst_69 = arith.constant dense<0.000000e+00> : vector<2xf32>
    %328 = vector.multi_reduction <add>, %327, %cst_69 [1] : vector<2x32xf32> to vector<2xf32>
    %329 = vector.shape_cast %328 : vector<2xf32> to vector<2x1xf32>
    %330 = vector.broadcast %18 : f32 to vector<2x1xf32>
    %331 = arith.addf %329, %330 : vector<2x1xf32>
    %332 = vector.broadcast %c3_i32 : i32 to vector<2x8xi32>
    %333 = arith.cmpi eq, %19, %332 : vector<2x8xi32>
    %334 = vector.shape_cast %331 : vector<2x1xf32> to vector<2x1xf32>
    %335 = vector.broadcast %334 : vector<2x1xf32> to vector<2x8xf32>
    %336 = arith.select %333, %335, %255 : vector<2x8xi1>, vector<2x8xf32>
    %337 = arith.maximumf %256, %331 : vector<2x1xf32>
    %338 = arith.subf %256, %337 : vector<2x1xf32>
    %339 = math.exp %338 : vector<2x1xf32>
    %340 = arith.subf %331, %337 : vector<2x1xf32>
    %341 = math.exp %340 : vector<2x1xf32>
    %342 = arith.mulf %339, %262 : vector<2x1xf32>
    %343 = arith.addf %342, %341 : vector<2x1xf32>
    %344 = vector.broadcast %339 : vector<2x1xf32> to vector<2x32xf32>
    %345 = arith.mulf %344, %267 : vector<2x32xf32>
    %346 = vector.broadcast %341 : vector<2x1xf32> to vector<2x32xf32>
    %347 = arith.mulf %346, %326 : vector<2x32xf32>
    %348 = arith.addf %345, %347 : vector<2x32xf32>
    %349 = vector.extract_strided_slice %273 {offsets = [0, 96], sizes = [2, 32], strides = [1, 1]} : vector<2x128xf32> to vector<2x32xf32>
    %350 = arith.addf %269, %349 : vector<2x32xf32>
    %c4_i32 = arith.constant 4 : i32
    %c2_i32_70 = arith.constant 2 : i32
    %351 = arith.muli %c4_i32, %c2_i32_70 : i32
    %352 = tpu.assume_multiple %351, 2 : i32
    %353 = arith.index_cast %352 : i32 to index
    %c0_71 = arith.constant 0 : index
    %354 = vector.load %arg15[%353, %c0_71] : memref<16x128xf32, #tpu.memory_space<vmem>>, vector<2x128xf32>
    %cst_72 = arith.constant dense<0.000000e+00> : vector<2x96xf32>
    %355 = tpu.matmul %301, %7, %cst_72 {dimension_numbers = #tpu.dot_dimension_numbers<[1], [0], [0], [1], [0, 0, 1, 1], [], []>} : vector<2x32xf32>, vector<32x96xf32>, vector<2x96xf32> -> vector<2x96xf32>
    %356 = vector.extract_strided_slice %354 {offsets = [0, 0], sizes = [2, 32], strides = [1, 1]} : vector<2x128xf32> to vector<2x32xf32>
    %357 = vector.extract_strided_slice %355 {offsets = [0, 0], sizes = [2, 32], strides = [1, 1]} : vector<2x96xf32> to vector<2x32xf32>
    %358 = arith.addf %356, %357 : vector<2x32xf32>
    %359 = arith.negf %358 : vector<2x32xf32>
    %360 = math.exp %359 : vector<2x32xf32>
    %cst_73 = arith.constant 1.000000e+00 : f32
    %361 = vector.broadcast %cst_73 : f32 to vector<2x32xf32>
    %362 = arith.addf %361, %360 : vector<2x32xf32>
    %363 = arith.divf %361, %362 : vector<2x32xf32>
    %364 = vector.extract_strided_slice %354 {offsets = [0, 32], sizes = [2, 32], strides = [1, 1]} : vector<2x128xf32> to vector<2x32xf32>
    %365 = vector.extract_strided_slice %355 {offsets = [0, 32], sizes = [2, 32], strides = [1, 1]} : vector<2x96xf32> to vector<2x32xf32>
    %366 = arith.addf %364, %365 : vector<2x32xf32>
    %367 = arith.negf %366 : vector<2x32xf32>
    %368 = math.exp %367 : vector<2x32xf32>
    %cst_74 = arith.constant 1.000000e+00 : f32
    %369 = vector.broadcast %cst_74 : f32 to vector<2x32xf32>
    %370 = arith.addf %369, %368 : vector<2x32xf32>
    %371 = arith.divf %369, %370 : vector<2x32xf32>
    %372 = vector.extract_strided_slice %354 {offsets = [0, 64], sizes = [2, 32], strides = [1, 1]} : vector<2x128xf32> to vector<2x32xf32>
    %373 = vector.extract_strided_slice %355 {offsets = [0, 64], sizes = [2, 32], strides = [1, 1]} : vector<2x96xf32> to vector<2x32xf32>
    %374 = arith.addf %373, %11 : vector<2x32xf32>
    %375 = arith.mulf %363, %374 : vector<2x32xf32>
    %376 = arith.addf %372, %375 : vector<2x32xf32>
    %377 = math.tanh %376 : vector<2x32xf32>
    %cst_75 = arith.constant 1.000000e+00 : f32
    %378 = vector.broadcast %cst_75 : f32 to vector<2x32xf32>
    %379 = arith.subf %378, %371 : vector<2x32xf32>
    %380 = arith.mulf %379, %377 : vector<2x32xf32>
    %381 = arith.mulf %371, %301 : vector<2x32xf32>
    %382 = arith.addf %380, %381 : vector<2x32xf32>
    %383 = tpu.concatenate %382, %326 in 1 : vector<2x32xf32>, vector<2x32xf32> -> vector<2x64xf32>
    %cst_76 = arith.constant dense<0.000000e+00> : vector<2x128xf32>
    %384 = tpu.matmul %383, %8, %cst_76 {dimension_numbers = #tpu.dot_dimension_numbers<[1], [0], [0], [1], [0, 0, 1, 1], [], []>} : vector<2x64xf32>, vector<64x128xf32>, vector<2x128xf32> -> vector<2x128xf32>
    %385 = arith.addf %384, %14 : vector<2x128xf32>
    %386 = vector.extract_strided_slice %385 {offsets = [0, 0], sizes = [2, 32], strides = [1, 1]} : vector<2x128xf32> to vector<2x32xf32>
    %387 = arith.negf %386 : vector<2x32xf32>
    %388 = math.exp %387 : vector<2x32xf32>
    %cst_77 = arith.constant 1.000000e+00 : f32
    %389 = vector.broadcast %cst_77 : f32 to vector<2x32xf32>
    %390 = arith.addf %389, %388 : vector<2x32xf32>
    %391 = arith.divf %389, %390 : vector<2x32xf32>
    %392 = vector.extract_strided_slice %385 {offsets = [0, 32], sizes = [2, 32], strides = [1, 1]} : vector<2x128xf32> to vector<2x32xf32>
    %393 = arith.negf %392 : vector<2x32xf32>
    %394 = math.exp %393 : vector<2x32xf32>
    %cst_78 = arith.constant 1.000000e+00 : f32
    %395 = vector.broadcast %cst_78 : f32 to vector<2x32xf32>
    %396 = arith.addf %395, %394 : vector<2x32xf32>
    %397 = arith.divf %395, %396 : vector<2x32xf32>
    %398 = vector.extract_strided_slice %385 {offsets = [0, 64], sizes = [2, 32], strides = [1, 1]} : vector<2x128xf32> to vector<2x32xf32>
    %399 = vector.extract_strided_slice %385 {offsets = [0, 96], sizes = [2, 32], strides = [1, 1]} : vector<2x128xf32> to vector<2x32xf32>
    %400 = arith.mulf %391, %399 : vector<2x32xf32>
    %401 = arith.addf %398, %400 : vector<2x32xf32>
    %402 = math.tanh %401 : vector<2x32xf32>
    %cst_79 = arith.constant 1.000000e+00 : f32
    %403 = vector.broadcast %cst_79 : f32 to vector<2x32xf32>
    %404 = arith.subf %403, %397 : vector<2x32xf32>
    %405 = arith.mulf %404, %402 : vector<2x32xf32>
    %406 = arith.mulf %397, %326 : vector<2x32xf32>
    %407 = arith.addf %405, %406 : vector<2x32xf32>
    %408 = arith.mulf %407, %17 : vector<2x32xf32>
    %cst_80 = arith.constant dense<0.000000e+00> : vector<2xf32>
    %409 = vector.multi_reduction <add>, %408, %cst_80 [1] : vector<2x32xf32> to vector<2xf32>
    %410 = vector.shape_cast %409 : vector<2xf32> to vector<2x1xf32>
    %411 = vector.broadcast %18 : f32 to vector<2x1xf32>
    %412 = arith.addf %410, %411 : vector<2x1xf32>
    %413 = vector.broadcast %c4_i32 : i32 to vector<2x8xi32>
    %414 = arith.cmpi eq, %19, %413 : vector<2x8xi32>
    %415 = vector.shape_cast %412 : vector<2x1xf32> to vector<2x1xf32>
    %416 = vector.broadcast %415 : vector<2x1xf32> to vector<2x8xf32>
    %417 = arith.select %414, %416, %336 : vector<2x8xi1>, vector<2x8xf32>
    %418 = arith.maximumf %337, %412 : vector<2x1xf32>
    %419 = arith.subf %337, %418 : vector<2x1xf32>
    %420 = math.exp %419 : vector<2x1xf32>
    %421 = arith.subf %412, %418 : vector<2x1xf32>
    %422 = math.exp %421 : vector<2x1xf32>
    %423 = arith.mulf %420, %343 : vector<2x1xf32>
    %424 = arith.addf %423, %422 : vector<2x1xf32>
    %425 = vector.broadcast %420 : vector<2x1xf32> to vector<2x32xf32>
    %426 = arith.mulf %425, %348 : vector<2x32xf32>
    %427 = vector.broadcast %422 : vector<2x1xf32> to vector<2x32xf32>
    %428 = arith.mulf %427, %407 : vector<2x32xf32>
    %429 = arith.addf %426, %428 : vector<2x32xf32>
    %430 = vector.extract_strided_slice %354 {offsets = [0, 96], sizes = [2, 32], strides = [1, 1]} : vector<2x128xf32> to vector<2x32xf32>
    %431 = arith.addf %350, %430 : vector<2x32xf32>
    %c5_i32 = arith.constant 5 : i32
    %c2_i32_81 = arith.constant 2 : i32
    %432 = arith.muli %c5_i32, %c2_i32_81 : i32
    %433 = tpu.assume_multiple %432, 2 : i32
    %434 = arith.index_cast %433 : i32 to index
    %c0_82 = arith.constant 0 : index
    %435 = vector.load %arg15[%434, %c0_82] : memref<16x128xf32, #tpu.memory_space<vmem>>, vector<2x128xf32>
    %cst_83 = arith.constant dense<0.000000e+00> : vector<2x96xf32>
    %436 = tpu.matmul %382, %7, %cst_83 {dimension_numbers = #tpu.dot_dimension_numbers<[1], [0], [0], [1], [0, 0, 1, 1], [], []>} : vector<2x32xf32>, vector<32x96xf32>, vector<2x96xf32> -> vector<2x96xf32>
    %437 = vector.extract_strided_slice %435 {offsets = [0, 0], sizes = [2, 32], strides = [1, 1]} : vector<2x128xf32> to vector<2x32xf32>
    %438 = vector.extract_strided_slice %436 {offsets = [0, 0], sizes = [2, 32], strides = [1, 1]} : vector<2x96xf32> to vector<2x32xf32>
    %439 = arith.addf %437, %438 : vector<2x32xf32>
    %440 = arith.negf %439 : vector<2x32xf32>
    %441 = math.exp %440 : vector<2x32xf32>
    %cst_84 = arith.constant 1.000000e+00 : f32
    %442 = vector.broadcast %cst_84 : f32 to vector<2x32xf32>
    %443 = arith.addf %442, %441 : vector<2x32xf32>
    %444 = arith.divf %442, %443 : vector<2x32xf32>
    %445 = vector.extract_strided_slice %435 {offsets = [0, 32], sizes = [2, 32], strides = [1, 1]} : vector<2x128xf32> to vector<2x32xf32>
    %446 = vector.extract_strided_slice %436 {offsets = [0, 32], sizes = [2, 32], strides = [1, 1]} : vector<2x96xf32> to vector<2x32xf32>
    %447 = arith.addf %445, %446 : vector<2x32xf32>
    %448 = arith.negf %447 : vector<2x32xf32>
    %449 = math.exp %448 : vector<2x32xf32>
    %cst_85 = arith.constant 1.000000e+00 : f32
    %450 = vector.broadcast %cst_85 : f32 to vector<2x32xf32>
    %451 = arith.addf %450, %449 : vector<2x32xf32>
    %452 = arith.divf %450, %451 : vector<2x32xf32>
    %453 = vector.extract_strided_slice %435 {offsets = [0, 64], sizes = [2, 32], strides = [1, 1]} : vector<2x128xf32> to vector<2x32xf32>
    %454 = vector.extract_strided_slice %436 {offsets = [0, 64], sizes = [2, 32], strides = [1, 1]} : vector<2x96xf32> to vector<2x32xf32>
    %455 = arith.addf %454, %11 : vector<2x32xf32>
    %456 = arith.mulf %444, %455 : vector<2x32xf32>
    %457 = arith.addf %453, %456 : vector<2x32xf32>
    %458 = math.tanh %457 : vector<2x32xf32>
    %cst_86 = arith.constant 1.000000e+00 : f32
    %459 = vector.broadcast %cst_86 : f32 to vector<2x32xf32>
    %460 = arith.subf %459, %452 : vector<2x32xf32>
    %461 = arith.mulf %460, %458 : vector<2x32xf32>
    %462 = arith.mulf %452, %382 : vector<2x32xf32>
    %463 = arith.addf %461, %462 : vector<2x32xf32>
    %464 = tpu.concatenate %463, %407 in 1 : vector<2x32xf32>, vector<2x32xf32> -> vector<2x64xf32>
    %cst_87 = arith.constant dense<0.000000e+00> : vector<2x128xf32>
    %465 = tpu.matmul %464, %8, %cst_87 {dimension_numbers = #tpu.dot_dimension_numbers<[1], [0], [0], [1], [0, 0, 1, 1], [], []>} : vector<2x64xf32>, vector<64x128xf32>, vector<2x128xf32> -> vector<2x128xf32>
    %466 = arith.addf %465, %14 : vector<2x128xf32>
    %467 = vector.extract_strided_slice %466 {offsets = [0, 0], sizes = [2, 32], strides = [1, 1]} : vector<2x128xf32> to vector<2x32xf32>
    %468 = arith.negf %467 : vector<2x32xf32>
    %469 = math.exp %468 : vector<2x32xf32>
    %cst_88 = arith.constant 1.000000e+00 : f32
    %470 = vector.broadcast %cst_88 : f32 to vector<2x32xf32>
    %471 = arith.addf %470, %469 : vector<2x32xf32>
    %472 = arith.divf %470, %471 : vector<2x32xf32>
    %473 = vector.extract_strided_slice %466 {offsets = [0, 32], sizes = [2, 32], strides = [1, 1]} : vector<2x128xf32> to vector<2x32xf32>
    %474 = arith.negf %473 : vector<2x32xf32>
    %475 = math.exp %474 : vector<2x32xf32>
    %cst_89 = arith.constant 1.000000e+00 : f32
    %476 = vector.broadcast %cst_89 : f32 to vector<2x32xf32>
    %477 = arith.addf %476, %475 : vector<2x32xf32>
    %478 = arith.divf %476, %477 : vector<2x32xf32>
    %479 = vector.extract_strided_slice %466 {offsets = [0, 64], sizes = [2, 32], strides = [1, 1]} : vector<2x128xf32> to vector<2x32xf32>
    %480 = vector.extract_strided_slice %466 {offsets = [0, 96], sizes = [2, 32], strides = [1, 1]} : vector<2x128xf32> to vector<2x32xf32>
    %481 = arith.mulf %472, %480 : vector<2x32xf32>
    %482 = arith.addf %479, %481 : vector<2x32xf32>
    %483 = math.tanh %482 : vector<2x32xf32>
    %cst_90 = arith.constant 1.000000e+00 : f32
    %484 = vector.broadcast %cst_90 : f32 to vector<2x32xf32>
    %485 = arith.subf %484, %478 : vector<2x32xf32>
    %486 = arith.mulf %485, %483 : vector<2x32xf32>
    %487 = arith.mulf %478, %407 : vector<2x32xf32>
    %488 = arith.addf %486, %487 : vector<2x32xf32>
    %489 = arith.mulf %488, %17 : vector<2x32xf32>
    %cst_91 = arith.constant dense<0.000000e+00> : vector<2xf32>
    %490 = vector.multi_reduction <add>, %489, %cst_91 [1] : vector<2x32xf32> to vector<2xf32>
    %491 = vector.shape_cast %490 : vector<2xf32> to vector<2x1xf32>
    %492 = vector.broadcast %18 : f32 to vector<2x1xf32>
    %493 = arith.addf %491, %492 : vector<2x1xf32>
    %494 = vector.broadcast %c5_i32 : i32 to vector<2x8xi32>
    %495 = arith.cmpi eq, %19, %494 : vector<2x8xi32>
    %496 = vector.shape_cast %493 : vector<2x1xf32> to vector<2x1xf32>
    %497 = vector.broadcast %496 : vector<2x1xf32> to vector<2x8xf32>
    %498 = arith.select %495, %497, %417 : vector<2x8xi1>, vector<2x8xf32>
    %499 = arith.maximumf %418, %493 : vector<2x1xf32>
    %500 = arith.subf %418, %499 : vector<2x1xf32>
    %501 = math.exp %500 : vector<2x1xf32>
    %502 = arith.subf %493, %499 : vector<2x1xf32>
    %503 = math.exp %502 : vector<2x1xf32>
    %504 = arith.mulf %501, %424 : vector<2x1xf32>
    %505 = arith.addf %504, %503 : vector<2x1xf32>
    %506 = vector.broadcast %501 : vector<2x1xf32> to vector<2x32xf32>
    %507 = arith.mulf %506, %429 : vector<2x32xf32>
    %508 = vector.broadcast %503 : vector<2x1xf32> to vector<2x32xf32>
    %509 = arith.mulf %508, %488 : vector<2x32xf32>
    %510 = arith.addf %507, %509 : vector<2x32xf32>
    %511 = vector.extract_strided_slice %435 {offsets = [0, 96], sizes = [2, 32], strides = [1, 1]} : vector<2x128xf32> to vector<2x32xf32>
    %512 = arith.addf %431, %511 : vector<2x32xf32>
    %c6_i32 = arith.constant 6 : i32
    %c2_i32_92 = arith.constant 2 : i32
    %513 = arith.muli %c6_i32, %c2_i32_92 : i32
    %514 = tpu.assume_multiple %513, 2 : i32
    %515 = arith.index_cast %514 : i32 to index
    %c0_93 = arith.constant 0 : index
    %516 = vector.load %arg15[%515, %c0_93] : memref<16x128xf32, #tpu.memory_space<vmem>>, vector<2x128xf32>
    %cst_94 = arith.constant dense<0.000000e+00> : vector<2x96xf32>
    %517 = tpu.matmul %463, %7, %cst_94 {dimension_numbers = #tpu.dot_dimension_numbers<[1], [0], [0], [1], [0, 0, 1, 1], [], []>} : vector<2x32xf32>, vector<32x96xf32>, vector<2x96xf32> -> vector<2x96xf32>
    %518 = vector.extract_strided_slice %516 {offsets = [0, 0], sizes = [2, 32], strides = [1, 1]} : vector<2x128xf32> to vector<2x32xf32>
    %519 = vector.extract_strided_slice %517 {offsets = [0, 0], sizes = [2, 32], strides = [1, 1]} : vector<2x96xf32> to vector<2x32xf32>
    %520 = arith.addf %518, %519 : vector<2x32xf32>
    %521 = arith.negf %520 : vector<2x32xf32>
    %522 = math.exp %521 : vector<2x32xf32>
    %cst_95 = arith.constant 1.000000e+00 : f32
    %523 = vector.broadcast %cst_95 : f32 to vector<2x32xf32>
    %524 = arith.addf %523, %522 : vector<2x32xf32>
    %525 = arith.divf %523, %524 : vector<2x32xf32>
    %526 = vector.extract_strided_slice %516 {offsets = [0, 32], sizes = [2, 32], strides = [1, 1]} : vector<2x128xf32> to vector<2x32xf32>
    %527 = vector.extract_strided_slice %517 {offsets = [0, 32], sizes = [2, 32], strides = [1, 1]} : vector<2x96xf32> to vector<2x32xf32>
    %528 = arith.addf %526, %527 : vector<2x32xf32>
    %529 = arith.negf %528 : vector<2x32xf32>
    %530 = math.exp %529 : vector<2x32xf32>
    %cst_96 = arith.constant 1.000000e+00 : f32
    %531 = vector.broadcast %cst_96 : f32 to vector<2x32xf32>
    %532 = arith.addf %531, %530 : vector<2x32xf32>
    %533 = arith.divf %531, %532 : vector<2x32xf32>
    %534 = vector.extract_strided_slice %516 {offsets = [0, 64], sizes = [2, 32], strides = [1, 1]} : vector<2x128xf32> to vector<2x32xf32>
    %535 = vector.extract_strided_slice %517 {offsets = [0, 64], sizes = [2, 32], strides = [1, 1]} : vector<2x96xf32> to vector<2x32xf32>
    %536 = arith.addf %535, %11 : vector<2x32xf32>
    %537 = arith.mulf %525, %536 : vector<2x32xf32>
    %538 = arith.addf %534, %537 : vector<2x32xf32>
    %539 = math.tanh %538 : vector<2x32xf32>
    %cst_97 = arith.constant 1.000000e+00 : f32
    %540 = vector.broadcast %cst_97 : f32 to vector<2x32xf32>
    %541 = arith.subf %540, %533 : vector<2x32xf32>
    %542 = arith.mulf %541, %539 : vector<2x32xf32>
    %543 = arith.mulf %533, %463 : vector<2x32xf32>
    %544 = arith.addf %542, %543 : vector<2x32xf32>
    %545 = tpu.concatenate %544, %488 in 1 : vector<2x32xf32>, vector<2x32xf32> -> vector<2x64xf32>
    %cst_98 = arith.constant dense<0.000000e+00> : vector<2x128xf32>
    %546 = tpu.matmul %545, %8, %cst_98 {dimension_numbers = #tpu.dot_dimension_numbers<[1], [0], [0], [1], [0, 0, 1, 1], [], []>} : vector<2x64xf32>, vector<64x128xf32>, vector<2x128xf32> -> vector<2x128xf32>
    %547 = arith.addf %546, %14 : vector<2x128xf32>
    %548 = vector.extract_strided_slice %547 {offsets = [0, 0], sizes = [2, 32], strides = [1, 1]} : vector<2x128xf32> to vector<2x32xf32>
    %549 = arith.negf %548 : vector<2x32xf32>
    %550 = math.exp %549 : vector<2x32xf32>
    %cst_99 = arith.constant 1.000000e+00 : f32
    %551 = vector.broadcast %cst_99 : f32 to vector<2x32xf32>
    %552 = arith.addf %551, %550 : vector<2x32xf32>
    %553 = arith.divf %551, %552 : vector<2x32xf32>
    %554 = vector.extract_strided_slice %547 {offsets = [0, 32], sizes = [2, 32], strides = [1, 1]} : vector<2x128xf32> to vector<2x32xf32>
    %555 = arith.negf %554 : vector<2x32xf32>
    %556 = math.exp %555 : vector<2x32xf32>
    %cst_100 = arith.constant 1.000000e+00 : f32
    %557 = vector.broadcast %cst_100 : f32 to vector<2x32xf32>
    %558 = arith.addf %557, %556 : vector<2x32xf32>
    %559 = arith.divf %557, %558 : vector<2x32xf32>
    %560 = vector.extract_strided_slice %547 {offsets = [0, 64], sizes = [2, 32], strides = [1, 1]} : vector<2x128xf32> to vector<2x32xf32>
    %561 = vector.extract_strided_slice %547 {offsets = [0, 96], sizes = [2, 32], strides = [1, 1]} : vector<2x128xf32> to vector<2x32xf32>
    %562 = arith.mulf %553, %561 : vector<2x32xf32>
    %563 = arith.addf %560, %562 : vector<2x32xf32>
    %564 = math.tanh %563 : vector<2x32xf32>
    %cst_101 = arith.constant 1.000000e+00 : f32
    %565 = vector.broadcast %cst_101 : f32 to vector<2x32xf32>
    %566 = arith.subf %565, %559 : vector<2x32xf32>
    %567 = arith.mulf %566, %564 : vector<2x32xf32>
    %568 = arith.mulf %559, %488 : vector<2x32xf32>
    %569 = arith.addf %567, %568 : vector<2x32xf32>
    %570 = arith.mulf %569, %17 : vector<2x32xf32>
    %cst_102 = arith.constant dense<0.000000e+00> : vector<2xf32>
    %571 = vector.multi_reduction <add>, %570, %cst_102 [1] : vector<2x32xf32> to vector<2xf32>
    %572 = vector.shape_cast %571 : vector<2xf32> to vector<2x1xf32>
    %573 = vector.broadcast %18 : f32 to vector<2x1xf32>
    %574 = arith.addf %572, %573 : vector<2x1xf32>
    %575 = vector.broadcast %c6_i32 : i32 to vector<2x8xi32>
    %576 = arith.cmpi eq, %19, %575 : vector<2x8xi32>
    %577 = vector.shape_cast %574 : vector<2x1xf32> to vector<2x1xf32>
    %578 = vector.broadcast %577 : vector<2x1xf32> to vector<2x8xf32>
    %579 = arith.select %576, %578, %498 : vector<2x8xi1>, vector<2x8xf32>
    %580 = arith.maximumf %499, %574 : vector<2x1xf32>
    %581 = arith.subf %499, %580 : vector<2x1xf32>
    %582 = math.exp %581 : vector<2x1xf32>
    %583 = arith.subf %574, %580 : vector<2x1xf32>
    %584 = math.exp %583 : vector<2x1xf32>
    %585 = arith.mulf %582, %505 : vector<2x1xf32>
    %586 = arith.addf %585, %584 : vector<2x1xf32>
    %587 = vector.broadcast %582 : vector<2x1xf32> to vector<2x32xf32>
    %588 = arith.mulf %587, %510 : vector<2x32xf32>
    %589 = vector.broadcast %584 : vector<2x1xf32> to vector<2x32xf32>
    %590 = arith.mulf %589, %569 : vector<2x32xf32>
    %591 = arith.addf %588, %590 : vector<2x32xf32>
    %592 = vector.extract_strided_slice %516 {offsets = [0, 96], sizes = [2, 32], strides = [1, 1]} : vector<2x128xf32> to vector<2x32xf32>
    %593 = arith.addf %512, %592 : vector<2x32xf32>
    %c7_i32 = arith.constant 7 : i32
    %c2_i32_103 = arith.constant 2 : i32
    %594 = arith.muli %c7_i32, %c2_i32_103 : i32
    %595 = tpu.assume_multiple %594, 2 : i32
    %596 = arith.index_cast %595 : i32 to index
    %c0_104 = arith.constant 0 : index
    %597 = vector.load %arg15[%596, %c0_104] : memref<16x128xf32, #tpu.memory_space<vmem>>, vector<2x128xf32>
    %cst_105 = arith.constant dense<0.000000e+00> : vector<2x96xf32>
    %598 = tpu.matmul %544, %7, %cst_105 {dimension_numbers = #tpu.dot_dimension_numbers<[1], [0], [0], [1], [0, 0, 1, 1], [], []>} : vector<2x32xf32>, vector<32x96xf32>, vector<2x96xf32> -> vector<2x96xf32>
    %599 = vector.extract_strided_slice %597 {offsets = [0, 0], sizes = [2, 32], strides = [1, 1]} : vector<2x128xf32> to vector<2x32xf32>
    %600 = vector.extract_strided_slice %598 {offsets = [0, 0], sizes = [2, 32], strides = [1, 1]} : vector<2x96xf32> to vector<2x32xf32>
    %601 = arith.addf %599, %600 : vector<2x32xf32>
    %602 = arith.negf %601 : vector<2x32xf32>
    %603 = math.exp %602 : vector<2x32xf32>
    %cst_106 = arith.constant 1.000000e+00 : f32
    %604 = vector.broadcast %cst_106 : f32 to vector<2x32xf32>
    %605 = arith.addf %604, %603 : vector<2x32xf32>
    %606 = arith.divf %604, %605 : vector<2x32xf32>
    %607 = vector.extract_strided_slice %597 {offsets = [0, 32], sizes = [2, 32], strides = [1, 1]} : vector<2x128xf32> to vector<2x32xf32>
    %608 = vector.extract_strided_slice %598 {offsets = [0, 32], sizes = [2, 32], strides = [1, 1]} : vector<2x96xf32> to vector<2x32xf32>
    %609 = arith.addf %607, %608 : vector<2x32xf32>
    %610 = arith.negf %609 : vector<2x32xf32>
    %611 = math.exp %610 : vector<2x32xf32>
    %cst_107 = arith.constant 1.000000e+00 : f32
    %612 = vector.broadcast %cst_107 : f32 to vector<2x32xf32>
    %613 = arith.addf %612, %611 : vector<2x32xf32>
    %614 = arith.divf %612, %613 : vector<2x32xf32>
    %615 = vector.extract_strided_slice %597 {offsets = [0, 64], sizes = [2, 32], strides = [1, 1]} : vector<2x128xf32> to vector<2x32xf32>
    %616 = vector.extract_strided_slice %598 {offsets = [0, 64], sizes = [2, 32], strides = [1, 1]} : vector<2x96xf32> to vector<2x32xf32>
    %617 = arith.addf %616, %11 : vector<2x32xf32>
    %618 = arith.mulf %606, %617 : vector<2x32xf32>
    %619 = arith.addf %615, %618 : vector<2x32xf32>
    %620 = math.tanh %619 : vector<2x32xf32>
    %cst_108 = arith.constant 1.000000e+00 : f32
    %621 = vector.broadcast %cst_108 : f32 to vector<2x32xf32>
    %622 = arith.subf %621, %614 : vector<2x32xf32>
    %623 = arith.mulf %622, %620 : vector<2x32xf32>
    %624 = arith.mulf %614, %544 : vector<2x32xf32>
    %625 = arith.addf %623, %624 : vector<2x32xf32>
    %626 = tpu.concatenate %625, %569 in 1 : vector<2x32xf32>, vector<2x32xf32> -> vector<2x64xf32>
    %cst_109 = arith.constant dense<0.000000e+00> : vector<2x128xf32>
    %627 = tpu.matmul %626, %8, %cst_109 {dimension_numbers = #tpu.dot_dimension_numbers<[1], [0], [0], [1], [0, 0, 1, 1], [], []>} : vector<2x64xf32>, vector<64x128xf32>, vector<2x128xf32> -> vector<2x128xf32>
    %628 = arith.addf %627, %14 : vector<2x128xf32>
    %629 = vector.extract_strided_slice %628 {offsets = [0, 0], sizes = [2, 32], strides = [1, 1]} : vector<2x128xf32> to vector<2x32xf32>
    %630 = arith.negf %629 : vector<2x32xf32>
    %631 = math.exp %630 : vector<2x32xf32>
    %cst_110 = arith.constant 1.000000e+00 : f32
    %632 = vector.broadcast %cst_110 : f32 to vector<2x32xf32>
    %633 = arith.addf %632, %631 : vector<2x32xf32>
    %634 = arith.divf %632, %633 : vector<2x32xf32>
    %635 = vector.extract_strided_slice %628 {offsets = [0, 32], sizes = [2, 32], strides = [1, 1]} : vector<2x128xf32> to vector<2x32xf32>
    %636 = arith.negf %635 : vector<2x32xf32>
    %637 = math.exp %636 : vector<2x32xf32>
    %cst_111 = arith.constant 1.000000e+00 : f32
    %638 = vector.broadcast %cst_111 : f32 to vector<2x32xf32>
    %639 = arith.addf %638, %637 : vector<2x32xf32>
    %640 = arith.divf %638, %639 : vector<2x32xf32>
    %641 = vector.extract_strided_slice %628 {offsets = [0, 64], sizes = [2, 32], strides = [1, 1]} : vector<2x128xf32> to vector<2x32xf32>
    %642 = vector.extract_strided_slice %628 {offsets = [0, 96], sizes = [2, 32], strides = [1, 1]} : vector<2x128xf32> to vector<2x32xf32>
    %643 = arith.mulf %634, %642 : vector<2x32xf32>
    %644 = arith.addf %641, %643 : vector<2x32xf32>
    %645 = math.tanh %644 : vector<2x32xf32>
    %cst_112 = arith.constant 1.000000e+00 : f32
    %646 = vector.broadcast %cst_112 : f32 to vector<2x32xf32>
    %647 = arith.subf %646, %640 : vector<2x32xf32>
    %648 = arith.mulf %647, %645 : vector<2x32xf32>
    %649 = arith.mulf %640, %569 : vector<2x32xf32>
    %650 = arith.addf %648, %649 : vector<2x32xf32>
    %651 = arith.mulf %650, %17 : vector<2x32xf32>
    %cst_113 = arith.constant dense<0.000000e+00> : vector<2xf32>
    %652 = vector.multi_reduction <add>, %651, %cst_113 [1] : vector<2x32xf32> to vector<2xf32>
    %653 = vector.shape_cast %652 : vector<2xf32> to vector<2x1xf32>
    %654 = vector.broadcast %18 : f32 to vector<2x1xf32>
    %655 = arith.addf %653, %654 : vector<2x1xf32>
    %656 = vector.broadcast %c7_i32 : i32 to vector<2x8xi32>
    %657 = arith.cmpi eq, %19, %656 : vector<2x8xi32>
    %658 = vector.shape_cast %655 : vector<2x1xf32> to vector<2x1xf32>
    %659 = vector.broadcast %658 : vector<2x1xf32> to vector<2x8xf32>
    %660 = arith.select %657, %659, %579 : vector<2x8xi1>, vector<2x8xf32>
    %661 = arith.maximumf %580, %655 : vector<2x1xf32>
    %662 = arith.subf %580, %661 : vector<2x1xf32>
    %663 = math.exp %662 : vector<2x1xf32>
    %664 = arith.subf %655, %661 : vector<2x1xf32>
    %665 = math.exp %664 : vector<2x1xf32>
    %666 = arith.mulf %663, %586 : vector<2x1xf32>
    %667 = arith.addf %666, %665 : vector<2x1xf32>
    %668 = vector.broadcast %663 : vector<2x1xf32> to vector<2x32xf32>
    %669 = arith.mulf %668, %591 : vector<2x32xf32>
    %670 = vector.broadcast %665 : vector<2x1xf32> to vector<2x32xf32>
    %671 = arith.mulf %670, %650 : vector<2x32xf32>
    %672 = arith.addf %669, %671 : vector<2x32xf32>
    %673 = vector.extract_strided_slice %597 {offsets = [0, 96], sizes = [2, 32], strides = [1, 1]} : vector<2x128xf32> to vector<2x32xf32>
    %674 = arith.addf %593, %673 : vector<2x32xf32>
    %c8_i32 = arith.constant 8 : i32
    %675 = tpu.reciprocal %667 {approx = true} : vector<2x1xf32> -> vector<2x1xf32>
    %676 = vector.broadcast %661 : vector<2x1xf32> to vector<2x8xf32>
    %677 = arith.subf %660, %676 : vector<2x8xf32>
    %678 = math.exp %677 : vector<2x8xf32>
    %679 = vector.broadcast %675 : vector<2x1xf32> to vector<2x8xf32>
    %680 = arith.mulf %678, %679 : vector<2x8xf32>
    %c0_114 = arith.constant 0 : index
    %c0_115 = arith.constant 0 : index
    %681 = vector.load %arg14[%c0_114, %c0_115] : memref<2x8xf32, #tpu.memory_space<vmem>>, vector<2x8xf32>
    tpu.vector_store %arg14[%c0_114, %c0_115], %680 {strides = array<i32>} : memref<2x8xf32, #tpu.memory_space<vmem>>, vector<2x8xf32>,
    %682 = vector.broadcast %675 : vector<2x1xf32> to vector<2x32xf32>
    %683 = arith.mulf %672, %682 : vector<2x32xf32>
    %cst_116 = arith.constant 1.250000e-01 : f32
    %684 = vector.broadcast %cst_116 : f32 to vector<2x32xf32>
    %685 = arith.mulf %674, %684 : vector<2x32xf32>
    %686 = arith.addf %683, %685 : vector<2x32xf32>
    %cst_117 = arith.constant dense<0.000000e+00> : vector<2xf32>
    %687 = vector.multi_reduction <add>, %686, %cst_117 [1] : vector<2x32xf32> to vector<2xf32>
    %688 = vector.shape_cast %687 : vector<2xf32> to vector<2x1xf32>
    %cst_118 = arith.constant 3.200000e+01 : f32
    %689 = vector.broadcast %cst_118 : f32 to vector<2x1xf32>
    %690 = arith.divf %688, %689 : vector<2x1xf32>
    %691 = vector.broadcast %690 : vector<2x1xf32> to vector<2x32xf32>
    %692 = arith.subf %686, %691 : vector<2x32xf32>
    %693 = arith.mulf %692, %692 : vector<2x32xf32>
    %cst_119 = arith.constant dense<0.000000e+00> : vector<2xf32>
    %694 = vector.multi_reduction <add>, %693, %cst_119 [1] : vector<2x32xf32> to vector<2xf32>
    %695 = vector.shape_cast %694 : vector<2xf32> to vector<2x1xf32>
    %cst_120 = arith.constant 3.200000e+01 : f32
    %696 = vector.broadcast %cst_120 : f32 to vector<2x1xf32>
    %697 = arith.divf %695, %696 : vector<2x1xf32>
    %698 = vector.broadcast %690 : vector<2x1xf32> to vector<2x32xf32>
    %699 = arith.subf %686, %698 : vector<2x32xf32>
    %cst_121 = arith.constant 9.99999974E-6 : f32
    %700 = vector.broadcast %cst_121 : f32 to vector<2x1xf32>
    %701 = arith.addf %697, %700 : vector<2x1xf32>
    %702 = math.rsqrt %701 : vector<2x1xf32>
    %703 = vector.broadcast %702 : vector<2x1xf32> to vector<2x32xf32>
    %704 = arith.mulf %699, %703 : vector<2x32xf32>
    %c0_122 = arith.constant 0 : index
    %c0_123 = arith.constant 0 : index
    %705 = vector.load %arg9[%c0_122, %c0_123] : memref<1x32xf32, #tpu.memory_space<vmem>>, vector<1x32xf32>
    %706 = vector.broadcast %705 : vector<1x32xf32> to vector<2x32xf32>
    %707 = arith.mulf %704, %706 : vector<2x32xf32>
    %c0_124 = arith.constant 0 : index
    %c0_125 = arith.constant 0 : index
    %708 = vector.load %arg10[%c0_124, %c0_125] : memref<1x32xf32, #tpu.memory_space<vmem>>, vector<1x32xf32>
    %709 = vector.broadcast %708 : vector<1x32xf32> to vector<2x32xf32>
    %710 = arith.addf %707, %709 : vector<2x32xf32>
    %711 = arith.negf %710 : vector<2x32xf32>
    %712 = math.exp %711 : vector<2x32xf32>
    %cst_126 = arith.constant 1.000000e+00 : f32
    %713 = vector.broadcast %cst_126 : f32 to vector<2x32xf32>
    %714 = arith.addf %713, %712 : vector<2x32xf32>
    %715 = arith.divf %713, %714 : vector<2x32xf32>
    %716 = arith.mulf %710, %715 : vector<2x32xf32>
    %c0_127 = arith.constant 0 : index
    %c0_128 = arith.constant 0 : index
    %717 = vector.load %arg11[%c0_127, %c0_128] : memref<32x2xf32, #tpu.memory_space<vmem>>, vector<32x2xf32>
    %cst_129 = arith.constant dense<0.000000e+00> : vector<2x2xf32>
    %718 = tpu.matmul %716, %717, %cst_129 {dimension_numbers = #tpu.dot_dimension_numbers<[1], [0], [0], [1], [0, 0, 1, 1], [], []>} : vector<2x32xf32>, vector<32x2xf32>, vector<2x2xf32> -> vector<2x2xf32>
    %c0_130 = arith.constant 0 : index
    %c0_131 = arith.constant 0 : index
    %719 = vector.load %arg12[%c0_130, %c0_131] : memref<1x2xf32, #tpu.memory_space<vmem>>, vector<1x2xf32>
    %720 = vector.broadcast %719 : vector<1x2xf32> to vector<2x2xf32>
    %721 = arith.addf %718, %720 : vector<2x2xf32>
    %c0_132 = arith.constant 0 : index
    %c0_133 = arith.constant 0 : index
    %722 = vector.load %arg13[%c0_132, %c0_133] : memref<2x2xf32, #tpu.memory_space<vmem>>, vector<2x2xf32>
    tpu.vector_store %arg13[%c0_132, %c0_133], %721 {strides = array<i32>} : memref<2x2xf32, #tpu.memory_space<vmem>>, vector<2x2xf32>,
    return
  }
}

</mosaic_0001>

<llo_original>
// kernel: forward.1
$region0: #{forward.1}
  #allocation0 [shape = 'u32[]', space=smem, size = 0x4, offset = 0x4, fixed_abs, tag = 'smem constant byte address 0x4 - core index']
  #allocation1 [shape = 'u32[72,128]{1,0:T(1,128)}', space=vmem, size = 0x9000, scoped, tag = 'internal scratch']
  #allocation2 [shape = 'f32[16,128]{1,0:T(8,128)}', space=vmem, size = 0x2000, scoped, tag = 'scratch operand']
  #allocation3 [shape = 'f32[1,1]{1,0:T(1,128)S(6)}', space=smem, size = 0x200, scoped, tag = 'scoped memory for forward.1']
  %s0 = inlined_call_operand.vmem [shape: f32[16,16], index: 0, kind: input, shape index: {}]
  %s1 = inlined_call_operand.vmem [shape: f32[16,128], index: 1, kind: input, shape index: {}]
  %s2 = inlined_call_operand.hbm [shape: f32[1,128], index: 2, kind: input, shape index: {}]
  %s3 = inlined_call_operand.hbm [shape: f32[32,96], index: 3, kind: input, shape index: {}]
  %s4 = inlined_call_operand.hbm [shape: f32[1,32], index: 4, kind: input, shape index: {}]
  %s5 = inlined_call_operand.vmem [shape: f32[64,128], index: 5, kind: input, shape index: {}]
  %s6 = inlined_call_operand.hbm [shape: f32[1,128], index: 6, kind: input, shape index: {}]
  %s7 = inlined_call_operand.hbm [shape: f32[1,32], index: 7, kind: input, shape index: {}]
  %s8 = inlined_call_operand.<no memory space> [shape: f32[1,1], index: 8, kind: input, shape index: {}]
  %s9 = inlined_call_operand.hbm [shape: f32[1,32], index: 9, kind: input, shape index: {}]
  %s10 = inlined_call_operand.hbm [shape: f32[1,32], index: 10, kind: input, shape index: {}]
  %s11 = inlined_call_operand.vmem [shape: f32[32,2], index: 11, kind: input, shape index: {}]
  %s12 = inlined_call_operand.hbm [shape: f32[1,2], index: 12, kind: input, shape index: {}]
  %s13 = inlined_call_operand.hbm [shape: f32[2,2], index: 13, kind: output, shape index: {0}]
  %s14 = inlined_call_operand.hbm [shape: f32[2,8], index: 14, kind: output, shape index: {1}]
  %15 = xla_tuple %s13, %s14
  %s16 = sld [smem:[#allocation0]]
  $region102: #{forward.1} parent=0
    _
  %s18 = ssub.s32 1, %s16
  %s19 = scalar_select 0, %s18, %s16
  %20 = sst [smem:[#allocation3]] %s8
  $region1: #{forward.1} parent=0
    #allocation4 [shape = 'u8[512]{0}', space=vmem, size = 0x400, scoped, tag = 'input window, operand 2, single buffered']
    #allocation5 [shape = 's32[1]{0}', space=sflag, size = 0x4, scoped, tag = 'scoped memory for forward.1']
    #allocation6 [shape = 's32[1]{0}', space=sflag, size = 0x4, scoped, tag = 'scoped memory for forward.1']
    #allocation7 [shape = 'u8[16384]{0}', space=vmem, size = 0x4000, scoped, tag = 'input window, operand 3, single buffered']
    #allocation8 [shape = 's32[1]{0}', space=sflag, size = 0x4, scoped, tag = 'scoped memory for forward.1']
    #allocation9 [shape = 'u8[512]{0}', space=vmem, size = 0x400, scoped, tag = 'input window, operand 4, single buffered']
    #allocation10 [shape = 'u8[512]{0}', space=vmem, size = 0x400, scoped, tag = 'input window, operand 6, single buffered']
    #allocation11 [shape = 's32[1]{0}', space=sflag, size = 0x4, scoped, tag = 'scoped memory for forward.1']
    #allocation12 [shape = 'u8[512]{0}', space=vmem, size = 0x400, scoped, tag = 'input window, operand 7, single buffered']
    #allocation13 [shape = 'u8[512]{0}', space=vmem, size = 0x400, scoped, tag = 'input window, operand 9, single buffered']
    #allocation14 [shape = 's32[1]{0}', space=sflag, size = 0x4, scoped, tag = 'scoped memory for forward.1']
    #allocation15 [shape = 'u8[512]{0}', space=vmem, size = 0x400, scoped, tag = 'input window, operand 10, single buffered']
    #allocation16 [shape = 'u8[512]{0}', space=vmem, size = 0x400, scoped, tag = 'input window, operand 12, single buffered']
    #allocation17 [shape = 's32[1]{0}', space=sflag, size = 0x4, scoped, tag = 'scoped memory for forward.1']
    #allocation18 [shape = 'u8[1024]{0}', space=vmem, size = 0x400, scoped, tag = 'output window, operand 0, single buffered']
    #allocation19 [shape = 'u8[1024]{0}', space=vmem, size = 0x400, scoped, tag = 'output window, operand 1, single buffered']
    #allocation20 [shape = 's32[1]{0}', space=sflag, size = 0x4, scoped, tag = 'scoped memory for forward.1']
    %21 = vsyncpa [#allocation5], 0
    %22 = vsyncpa [#allocation8], 0
    %23 = vsyncpa [#allocation11], 0
    %24 = vsyncpa [#allocation14], 0
    %25 = vsyncpa [#allocation17], 0
    %26 = vsyncpa [#allocation6], 0
    %27 = vsyncpa [#allocation20], 0
    // Predicated region
    $region2: #{forward.1} parent=1 // pred_check
      _
    $region3: #{forward.1} parent=1 // pred_check_branch
      %29 = sbr.rel (0) target = $region5
    $region4: #{forward.1} parent=1 // pred_region
      _
    $region5: #{forward.1} parent=1 // pred_fallthru
      _
    // Predicated region
    $region6: #{forward.1} parent=1 // pred_check
      _
    $region7: #{forward.1} parent=1 // pred_check_branch
      %31 = sbr.rel (0) target = $region9
    $region8: #{forward.1} parent=1 // pred_region
      _
    $region9: #{forward.1} parent=1 // pred_fallthru
      _
    // Predicated region
    $region10: #{forward.1} parent=1 // pred_check
      _
    $region11: #{forward.1} parent=1 // pred_check_branch
      %33 = sbr.rel (0) target = $region13
    $region12: #{forward.1} parent=1 // pred_region
      %35 = vsyncadd [#allocation5], 0
      %s37 = sshll.u32 %s2, 4
      %s38 = int_to_ptr.hbm [resolvable:$true] %s37
      %s39 = sshll.u32 [#allocation4], 4
      %s40 = int_to_ptr.vmem [resolvable:$true] %s39
      %42 = dma.hbm_to_vmem [thread:$0]  %s38, 16, %s40, [#allocation5]
    $region13: #{forward.1} parent=1 // pred_fallthru
      _
    // Predicated region
    $region14: #{forward.1} parent=1 // pred_check
      _
    $region15: #{forward.1} parent=1 // pred_check_branch
      %44 = sbr.rel (0) target = $region17
    $region16: #{forward.1} parent=1 // pred_region
      %46 = vsyncadd [#allocation8], 0
      %s47 = sshll.u32 %s3, 4
      %s48 = int_to_ptr.hbm [resolvable:$true] %s47
      %s49 = sshll.u32 [#allocation7], 4
      %s50 = int_to_ptr.vmem [resolvable:$true] %s49
      %55 = dma.hbm_to_vmem [thread:$0]  %s48, 512, %s50, [#allocation8], 128, 128, 8
    $region17: #{forward.1} parent=1 // pred_fallthru
      _
    // Predicated region
    $region18: #{forward.1} parent=1 // pred_check
      _
    $region19: #{forward.1} parent=1 // pred_check_branch
      %57 = sbr.rel (0) target = $region21
    $region20: #{forward.1} parent=1 // pred_region
      %59 = vsyncadd [#allocation8], 0
      %s61 = sshll.u32 %s4, 4
      %s62 = int_to_ptr.hbm [resolvable:$true] %s61
      %s63 = sshll.u32 [#allocation9], 4
      %s64 = int_to_ptr.vmem [resolvable:$true] %s63
      %66 = dma.hbm_to_vmem [thread:$0]  %s62, 16, %s64, [#allocation8]
    $region21: #{forward.1} parent=1 // pred_fallthru
      _
    // Predicated region
    $region22: #{forward.1} parent=1 // pred_check
      _
    $region23: #{forward.1} parent=1 // pred_check_branch
      %68 = sbr.rel (0) target = $region25
    $region24: #{forward.1} parent=1 // pred_region
      _
    $region25: #{forward.1} parent=1 // pred_fallthru
      _
    // Predicated region
    $region26: #{forward.1} parent=1 // pred_check
      _
    $region27: #{forward.1} parent=1 // pred_check_branch
      %70 = sbr.rel (0) target = $region29
    $region28: #{forward.1} parent=1 // pred_region
      %72 = vsyncadd [#allocation11], 0
      %s74 = sshll.u32 %s6, 4
      %s75 = int_to_ptr.hbm [resolvable:$true] %s74
      %s76 = sshll.u32 [#allocation10], 4
      %s77 = int_to_ptr.vmem [resolvable:$true] %s76
      %79 = dma.hbm_to_vmem [thread:$0]  %s75, 16, %s77, [#allocation11]
    $region29: #{forward.1} parent=1 // pred_fallthru
      _
    // Predicated region
    $region30: #{forward.1} parent=1 // pred_check
      _
    $region31: #{forward.1} parent=1 // pred_check_branch
      %81 = sbr.rel (0) target = $region33
    $region32: #{forward.1} parent=1 // pred_region
      %83 = vsyncadd [#allocation11], 0
      %s85 = sshll.u32 %s7, 4
      %s86 = int_to_ptr.hbm [resolvable:$true] %s85
      %s87 = sshll.u32 [#allocation12], 4
      %s88 = int_to_ptr.vmem [resolvable:$true] %s87
      %90 = dma.hbm_to_vmem [thread:$0]  %s86, 16, %s88, [#allocation11]
    $region33: #{forward.1} parent=1 // pred_fallthru
      _
    // Predicated region
    $region34: #{forward.1} parent=1 // pred_check
      _
    $region35: #{forward.1} parent=1 // pred_check_branch
      %92 = sbr.rel (0) target = $region37
    $region36: #{forward.1} parent=1 // pred_region
      _
    $region37: #{forward.1} parent=1 // pred_fallthru
      _
    // Predicated region
    $region38: #{forward.1} parent=1 // pred_check
      _
    $region39: #{forward.1} parent=1 // pred_check_branch
      %94 = sbr.rel (0) target = $region41
    $region40: #{forward.1} parent=1 // pred_region
      %96 = vsyncadd [#allocation14], 0
      %s98 = sshll.u32 %s9, 4
      %s99 = int_to_ptr.hbm [resolvable:$true] %s98
      %s100 = sshll.u32 [#allocation13], 4
      %s101 = int_to_ptr.vmem [resolvable:$true] %s100
      %103 = dma.hbm_to_vmem [thread:$0]  %s99, 16, %s101, [#allocation14]
    $region41: #{forward.1} parent=1 // pred_fallthru
      _
    // Predicated region
    $region42: #{forward.1} parent=1 // pred_check
      _
    $region43: #{forward.1} parent=1 // pred_check_branch
      %105 = sbr.rel (0) target = $region45
    $region44: #{forward.1} parent=1 // pred_region
      %107 = vsyncadd [#allocation14], 0
      %s109 = sshll.u32 %s10, 4
      %s110 = int_to_ptr.hbm [resolvable:$true] %s109
      %s111 = sshll.u32 [#allocation15], 4
      %s112 = int_to_ptr.vmem [resolvable:$true] %s111
      %114 = dma.hbm_to_vmem [thread:$0]  %s110, 16, %s112, [#allocation14]
    $region45: #{forward.1} parent=1 // pred_fallthru
      _
    // Predicated region
    $region46: #{forward.1} parent=1 // pred_check
      _
    $region47: #{forward.1} parent=1 // pred_check_branch
      %116 = sbr.rel (0) target = $region49
    $region48: #{forward.1} parent=1 // pred_region
      _
    $region49: #{forward.1} parent=1 // pred_fallthru
      _
    // Predicated region
    $region50: #{forward.1} parent=1 // pred_check
      _
    $region51: #{forward.1} parent=1 // pred_check_branch
      %118 = sbr.rel (0) target = $region53
    $region52: #{forward.1} parent=1 // pred_region
      %120 = vsyncadd [#allocation17], 0
      %s122 = sshll.u32 %s12, 4
      %s123 = int_to_ptr.hbm [resolvable:$true] %s122
      %s124 = sshll.u32 [#allocation16], 4
      %s125 = int_to_ptr.vmem [resolvable:$true] %s124
      %127 = dma.hbm_to_vmem [thread:$0]  %s123, 16, %s125, [#allocation17]
    $region53: #{forward.1} parent=1 // pred_fallthru
      _
    // Predicated region
    $region54: #{forward.1} parent=1 // pred_check
      _
    $region55: #{forward.1} parent=1 // pred_check_branch
      %129 = sbr.rel (0) target = $region57
    $region56: #{forward.1} parent=1 // pred_region
      %131 = dma.done [#allocation5], 16
    $region57: #{forward.1} parent=1 // pred_fallthru
      _
    // Predicated region
    $region58: #{forward.1} parent=1 // pred_check
      _
    $region59: #{forward.1} parent=1 // pred_check_branch
      %133 = sbr.rel (0) target = $region61
    $region60: #{forward.1} parent=1 // pred_region
      %135 = dma.done [#allocation8], 512
    $region61: #{forward.1} parent=1 // pred_fallthru
      _
    // Predicated region
    $region62: #{forward.1} parent=1 // pred_check
      _
    $region63: #{forward.1} parent=1 // pred_check_branch
      %137 = sbr.rel (0) target = $region65
    $region64: #{forward.1} parent=1 // pred_region
      %139 = dma.done [#allocation8], 16
    $region65: #{forward.1} parent=1 // pred_fallthru
      _
    // Predicated region
    $region66: #{forward.1} parent=1 // pred_check
      _
    $region67: #{forward.1} parent=1 // pred_check_branch
      %141 = sbr.rel (0) target = $region69
    $region68: #{forward.1} parent=1 // pred_region
      %143 = dma.done [#allocation11], 16
    $region69: #{forward.1} parent=1 // pred_fallthru
      _
    // Predicated region
    $region70: #{forward.1} parent=1 // pred_check
      _
    $region71: #{forward.1} parent=1 // pred_check_branch
      %145 = sbr.rel (0) target = $region73
    $region72: #{forward.1} parent=1 // pred_region
      %147 = dma.done [#allocation11], 16
    $region73: #{forward.1} parent=1 // pred_fallthru
      _
    // Predicated region
    $region74: #{forward.1} parent=1 // pred_check
      _
    $region75: #{forward.1} parent=1 // pred_check_branch
      %149 = sbr.rel (0) target = $region77
    $region76: #{forward.1} parent=1 // pred_region
      %151 = dma.done [#allocation14], 16
    $region77: #{forward.1} parent=1 // pred_fallthru
      _
    // Predicated region
    $region78: #{forward.1} parent=1 // pred_check
      _
    $region79: #{forward.1} parent=1 // pred_check_branch
      %153 = sbr.rel (0) target = $region81
    $region80: #{forward.1} parent=1 // pred_region
      %155 = dma.done [#allocation14], 16
    $region81: #{forward.1} parent=1 // pred_fallthru
      _
    // Predicated region
    $region82: #{forward.1} parent=1 // pred_check
      _
    $region83: #{forward.1} parent=1 // pred_check_branch
      %157 = sbr.rel (0) target = $region85
    $region84: #{forward.1} parent=1 // pred_region
      %159 = dma.done [#allocation17], 16
    $region85: #{forward.1} parent=1 // pred_fallthru
      _
    %v160 = vld [vmem:[%s0] sm:$0xff]
    %v161 = vld [vmem:[%s0 + $0x8] sm:$0xff]
    %v162 = vld [vmem:[%s1] sm:$0xff]
    %v163 = vld [vmem:[%s1 + $0x8] sm:$0xff]
    %v164 = vld [vmem:[#allocation4] sm:$0x1]
    %v166 = vperm.slane %v164, 0
    %vm168 = vcmask 130048
    %v170 = vsel %vm168, %v160, 0
    %v173 = vsel %vm168, %v161, 0
    %175 = vmatpush.msra.mxu0 0.0
    %176 = vmatpush.msra.mxu0 0.0
    %177 = vmatpush.msra.mxu0 0.0
    %178 = vmatpush.msra.mxu0 0.0
    %179 = vmatpush.msra.mxu0 0.0
    %180 = vmatpush.msra.mxu0 0.0
    %181 = vmatpush.msra.mxu0 0.0
    %182 = vmatpush.msra.mxu0 0.0
    %183 = vmatpush.msra.mxu0 0.0
    %184 = vmatpush.msra.mxu0 0.0
    %185 = vmatpush.msra.mxu0 0.0
    %186 = vmatpush.msra.mxu0 0.0
    %187 = vmatpush.msra.mxu0 0.0
    %188 = vmatpush.msra.mxu0 0.0
    %189 = vmatpush.msra.mxu0 %v163
    %190 = vmatpush.msra.mxu0 %v162
    %191 = vmatmul.f32.gmra.mxu0 %v170
    %v192 = vpop.f32.mrf.mxu0
    %v193 = vadd.f32 %v166, %v192
    %194 = vmatmul.f32.gmra.mxu0 %v173
    %v195 = vpop.f32.mrf.mxu0
    %v196 = vadd.f32 %v166, %v195
    %197 = vdwg.mxu0
    %198 = vst [vmem:[#allocation2] sm:$0xff] %v193
    %199 = vst [vmem:[#allocation2 + $0x8] sm:$0xff] %v196
    %v200 = vld [vmem:[#allocation7] sm:$0xff]
    %v201 = vld [vmem:[#allocation7 + $0x8] sm:$0xff]
    %v202 = vld [vmem:[#allocation7 + $0x10] sm:$0xff]
    %v203 = vld [vmem:[#allocation7 + $0x18] sm:$0xff]
    %v204 = vld [vmem:[%s5] sm:$0xff]
    %v205 = vld [vmem:[%s5 + $0x8] sm:$0xff]
    %v206 = vld [vmem:[%s5 + $0x10] sm:$0xff]
    %v207 = vld [vmem:[%s5 + $0x18] sm:$0xff]
    %v208 = vld [vmem:[%s5 + $0x20] sm:$0xff]
    %v209 = vld [vmem:[%s5 + $0x28] sm:$0xff]
    %v210 = vld [vmem:[%s5 + $0x30] sm:$0xff]
    %v211 = vld [vmem:[%s5 + $0x38] sm:$0xff]
    %v212 = vld [vmem:[#allocation9] sm:$0x1]
    %v214 = vperm.slane %v212, 0
    %v215 = vld [vmem:[#allocation10] sm:$0x1]
    %v217 = vperm.slane %v215, 0
    %v219 = vld [vmem:[#allocation12] sm:$0x1]
    %v221 = vperm.slane %v219, 0
    %s222 = sld [smem:[#allocation3]]
    %v223 = vlaneseq
    %v224 = vand.u32 %v223, 127
    %v225 = vld [vmem:[#allocation2] sm:$0x3]
    %vm226 = vcmask 261120
    %v228 = vsel %vm226, 0.0, 0
    %230 = vmatpush.msra.mxu0 0.0
    %231 = vmatpush.msra.mxu0 0.0
    %232 = vmatpush.msra.mxu0 0.0
    %233 = vmatpush.msra.mxu0 0.0
    %234 = vmatpush.msra.mxu0 0.0
    %235 = vmatpush.msra.mxu0 0.0
    %236 = vmatpush.msra.mxu0 0.0
    %237 = vmatpush.msra.mxu0 0.0
    %238 = vmatpush.msra.mxu0 0.0
    %239 = vmatpush.msra.mxu0 0.0
    %240 = vmatpush.msra.mxu0 0.0
    %241 = vmatpush.msra.mxu0 0.0
    %242 = vmatpush.msra.mxu0 %v203
    %243 = vmatpush.msra.mxu0 %v202
    %244 = vmatpush.msra.mxu0 %v201
    %245 = vmatpush.msra.mxu0 %v200
    %246 = vmatmul.f32.gmra.mxu0 %v228
    %v247 = vpop.f32.mrf.mxu0
    %v248 = vadd.f32 0.0, %v247
    %249 = vdwg.mxu0
    %v250 = vadd.f32 %v225, %v248
    %v251 = vxor.u32 %v250, 2147483648
    %v252 = vmul.f32 %v251, 1.442695
    %v253 = vpow.pop %v252
    %v254 = vadd.f32 %v253, 1.0
    %v255 = vrcp.pop %v254
    %v256 = vmul.f32 %v254, %v255
    %v257 = vsub.f32 1.0, %v256
    %v258 = vmul.f32 %v255, %v257
    %v259 = vadd.f32 %v255, %v258
    %vm260 = vweird.f32 %v254
    %vm261 = vweird.f32 %v255
    %vm262 = vmor %vm260, %vm261
    %v263 = vsel %vm262, %v255, %v259
    %v264 = vand.u32 2147483647, %v254
    %vm265 = vcmp.eq.f32.partialorder %v264, 8.507059e+37
    %v266 = vand.u32 %v254, 2147483648
    %v267 = vor.u32 1.1754944e-38, %v266
    %v268 = vsel %vm265, %v267, %v263
    %v269 = vmul.f32 1.0, %v268
    %270 = vrot.lane.b32.xlu0 %v214, 64
    %v271 = vpop.permute.xlu0 %270
    %v273 = vadd.f32 %v248, %v271
    %275 = vrot.lane.b32.xlu0 %v273, 64
    %v276 = vpop.permute.xlu0 %275
    %v278 = vmul.f32 %v269, %v276
    %280 = vrot.lane.b32.xlu0 %v278, 64
    %v281 = vpop.permute.xlu0 %280
    %v283 = vadd.f32 %v225, %v281
    %v284 = vtanh.pop %v283
    %v285 = vsub.f32 1.0, %v269
    %287 = vrot.lane.b32.xlu0 %v284, 96
    %v288 = vpop.permute.xlu0 %287
    %v290 = vmul.f32 %v285, %v288
    %v291 = vmul.f32 %v269, 0.0
    %v292 = vadd.f32 %v290, %v291
    %294 = vrot.lane.b32.xlu0 %v292, 96
    %v295 = vpop.permute.xlu0 %294
    %v297 = vsel %vm226, %v295, 0.0
    %vm298 = vcmask 523264
    %v300 = vsel %vm298, %v297, 0
    %302 = vmatpush.msra.mxu0 0.0
    %303 = vmatpush.msra.mxu0 0.0
    %304 = vmatpush.msra.mxu0 0.0
    %305 = vmatpush.msra.mxu0 0.0
    %306 = vmatpush.msra.mxu0 0.0
    %307 = vmatpush.msra.mxu0 0.0
    %308 = vmatpush.msra.mxu0 0.0
    %309 = vmatpush.msra.mxu0 0.0
    %310 = vmatpush.msra.mxu0 %v211
    %311 = vmatpush.msra.mxu0 %v210
    %312 = vmatpush.msra.mxu0 %v209
    %313 = vmatpush.msra.mxu0 %v208
    %314 = vmatpush.msra.mxu0 %v207
    %315 = vmatpush.msra.mxu0 %v206
    %316 = vmatpush.msra.mxu0 %v205
    %317 = vmatpush.msra.mxu0 %v204
    %318 = vmatmul.f32.gmra.mxu0 %v300
    %v319 = vpop.f32.mrf.mxu0
    %v320 = vadd.f32 %v217, %v319
    %321 = vdwg.mxu0
    %v322 = vxor.u32 %v320, 2147483648
    %v323 = vmul.f32 %v322, 1.442695
    %v324 = vpow.pop %v323
    %v325 = vadd.f32 %v324, 1.0
    %v326 = vrcp.pop %v325
    %v327 = vmul.f32 %v325, %v326
    %v328 = vsub.f32 1.0, %v327
    %v329 = vmul.f32 %v326, %v328
    %v330 = vadd.f32 %v326, %v329
    %vm331 = vweird.f32 %v325
    %vm332 = vweird.f32 %v326
    %vm333 = vmor %vm331, %vm332
    %v334 = vsel %vm333, %v326, %v330
    %v335 = vand.u32 2147483647, %v325
    %vm336 = vcmp.eq.f32.partialorder %v335, 8.507059e+37
    %v337 = vand.u32 %v325, 2147483648
    %v338 = vor.u32 1.1754944e-38, %v337
    %v339 = vsel %vm336, %v338, %v334
    %v340 = vmul.f32 1.0, %v339
    %342 = vrot.lane.b32.xlu0 %v320, 32
    %v343 = vpop.permute.xlu0 %342
    %v345 = vmul.f32 %v340, %v343
    %347 = vrot.lane.b32.xlu0 %v345, 64
    %v348 = vpop.permute.xlu0 %347
    %v350 = vadd.f32 %v320, %v348
    %v351 = vtanh.pop %v350
    %v352 = vsub.f32 1.0, %v340
    %354 = vrot.lane.b32.xlu0 %v351, 96
    %v355 = vpop.permute.xlu0 %354
    %v357 = vmul.f32 %v352, %v355
    %v358 = vmul.f32 %v340, 0.0
    %v359 = vadd.f32 %v357, %v358
    %360 = vrot.lane.b32.xlu0 %v221, 32
    %v361 = vpop.permute.xlu0 %360
    %v363 = vmul.f32 %v359, %v361
    %365 = vrot.lane.b32.xlu0 %v363, 96
    %v366 = vpop.permute.xlu0 %365
    %vm368 = vcmask 254976
    %v369 = vsel %vm368, %v366, 0.0
    %370 = vadd.xlane.f32.xlu0 %v369
    %v371 = vpop.xlane.xlu0 %370
    %v372 = vstv %s222
    %v373 = vadd.f32 %v371, %v372
    %vm374 = vcmp.eq.s32.totalorder %v224, 0
    %v375 = vsel %vm374, %v373, 0.0
    %v376 = vmax.f32 %v373, -1e+30
    %v377 = vsub.f32 -1e+30, %v376
    %v378 = vmul.f32 %v377, 1.442695
    %v379 = vpow.pop %v378
    %v380 = vsub.f32 %v373, %v376
    %v381 = vmul.f32 %v380, 1.442695
    %v382 = vpow.pop %v381
    %v383 = vmul.f32 %v379, 0.0
    %v384 = vadd.f32 %v383, %v382
    %v385 = vmul.f32 %v382, %v359
    %v386 = vadd.f32 %v383, %v385
    %v387 = vadd.f32 %v225, 0.0
    %s388 = scalar_lea.vmem [#allocation2], 2
    %v389 = vld [vmem:[%s388] sm:$0x3]
    %v390 = vsel %vm226, %v295, 0
    %392 = vmatpush.msra.mxu0 0.0
    %393 = vmatpush.msra.mxu0 0.0
    %394 = vmatpush.msra.mxu0 0.0
    %395 = vmatpush.msra.mxu0 0.0
    %396 = vmatpush.msra.mxu0 0.0
    %397 = vmatpush.msra.mxu0 0.0
    %398 = vmatpush.msra.mxu0 0.0
    %399 = vmatpush.msra.mxu0 0.0
    %400 = vmatpush.msra.mxu0 0.0
    %401 = vmatpush.msra.mxu0 0.0
    %402 = vmatpush.msra.mxu0 0.0
    %403 = vmatpush.msra.mxu0 0.0
    %404 = vmatpush.msra.mxu0 %v203
    %405 = vmatpush.msra.mxu0 %v202
    %406 = vmatpush.msra.mxu0 %v201
    %407 = vmatpush.msra.mxu0 %v200
    %408 = vmatmul.f32.gmra.mxu0 %v390
    %v409 = vpop.f32.mrf.mxu0
    %v410 = vadd.f32 0.0, %v409
    %411 = vdwg.mxu0
    %v412 = vadd.f32 %v389, %v410
    %v413 = vxor.u32 %v412, 2147483648
    %v414 = vmul.f32 %v413, 1.442695
    %v415 = vpow.pop %v414
    %v416 = vadd.f32 %v415, 1.0
    %v417 = vrcp.pop %v416
    %v418 = vmul.f32 %v416, %v417
    %v419 = vsub.f32 1.0, %v418
    %v420 = vmul.f32 %v417, %v419
    %v421 = vadd.f32 %v417, %v420
    %vm422 = vweird.f32 %v416
    %vm423 = vweird.f32 %v417
    %vm424 = vmor %vm422, %vm423
    %v425 = vsel %vm424, %v417, %v421
    %v426 = vand.u32 2147483647, %v416
    %vm427 = vcmp.eq.f32.partialorder %v426, 8.507059e+37
    %v428 = vand.u32 %v416, 2147483648
    %v429 = vor.u32 1.1754944e-38, %v428
    %v430 = vsel %vm427, %v429, %v425
    %v431 = vmul.f32 1.0, %v430
    %v432 = vadd.f32 %v410, %v271
    %434 = vrot.lane.b32.xlu0 %v432, 64
    %v435 = vpop.permute.xlu0 %434
    %v437 = vmul.f32 %v431, %v435
    %439 = vrot.lane.b32.xlu0 %v437, 64
    %v440 = vpop.permute.xlu0 %439
    %v442 = vadd.f32 %v389, %v440
    %v443 = vtanh.pop %v442
    %v444 = vsub.f32 1.0, %v431
    %446 = vrot.lane.b32.xlu0 %v443, 96
    %v447 = vpop.permute.xlu0 %446
    %v449 = vmul.f32 %v444, %v447
    %v450 = vmul.f32 %v431, %v292
    %v451 = vadd.f32 %v449, %v450
    %453 = vrot.lane.b32.xlu0 %v451, 96
    %v454 = vpop.permute.xlu0 %453
    %v456 = vsel %vm226, %v454, %v359
    %v458 = vsel %vm298, %v456, 0
    %460 = vmatpush.msra.mxu0 0.0
    %461 = vmatpush.msra.mxu0 0.0
    %462 = vmatpush.msra.mxu0 0.0
    %463 = vmatpush.msra.mxu0 0.0
    %464 = vmatpush.msra.mxu0 0.0
    %465 = vmatpush.msra.mxu0 0.0
    %466 = vmatpush.msra.mxu0 0.0
    %467 = vmatpush.msra.mxu0 0.0
    %468 = vmatpush.msra.mxu0 %v211
    %469 = vmatpush.msra.mxu0 %v210
    %470 = vmatpush.msra.mxu0 %v209
    %471 = vmatpush.msra.mxu0 %v208
    %472 = vmatpush.msra.mxu0 %v207
    %473 = vmatpush.msra.mxu0 %v206
    %474 = vmatpush.msra.mxu0 %v205
    %475 = vmatpush.msra.mxu0 %v204
    %476 = vmatmul.f32.gmra.mxu0 %v458
    %v477 = vpop.f32.mrf.mxu0
    %v478 = vadd.f32 %v217, %v477
    %479 = vdwg.mxu0
    %v480 = vxor.u32 %v478, 2147483648
    %v481 = vmul.f32 %v480, 1.442695
    %v482 = vpow.pop %v481
    %v483 = vadd.f32 %v482, 1.0
    %v484 = vrcp.pop %v483
    %v485 = vmul.f32 %v483, %v484
    %v486 = vsub.f32 1.0, %v485
    %v487 = vmul.f32 %v484, %v486
    %v488 = vadd.f32 %v484, %v487
    %vm489 = vweird.f32 %v483
    %vm490 = vweird.f32 %v484
    %vm491 = vmor %vm489, %vm490
    %v492 = vsel %vm491, %v484, %v488
    %v493 = vand.u32 2147483647, %v483
    %vm494 = vcmp.eq.f32.partialorder %v493, 8.507059e+37
    %v495 = vand.u32 %v483, 2147483648
    %v496 = vor.u32 1.1754944e-38, %v495
    %v497 = vsel %vm494, %v496, %v492
    %v498 = vmul.f32 1.0, %v497
    %500 = vrot.lane.b32.xlu0 %v478, 32
    %v501 = vpop.permute.xlu0 %500
    %v503 = vmul.f32 %v498, %v501
    %505 = vrot.lane.b32.xlu0 %v503, 64
    %v506 = vpop.permute.xlu0 %505
    %v508 = vadd.f32 %v478, %v506
    %v509 = vtanh.pop %v508
    %v510 = vsub.f32 1.0, %v498
    %512 = vrot.lane.b32.xlu0 %v509, 96
    %v513 = vpop.permute.xlu0 %512
    %v515 = vmul.f32 %v510, %v513
    %v516 = vmul.f32 %v498, %v359
    %v517 = vadd.f32 %v515, %v516
    %v518 = vmul.f32 %v517, %v361
    %520 = vrot.lane.b32.xlu0 %v518, 96
    %v521 = vpop.permute.xlu0 %520
    %v523 = vsel %vm368, %v521, 0.0
    %524 = vadd.xlane.f32.xlu0 %v523
    %v525 = vpop.xlane.xlu0 %524
    %v526 = vadd.f32 %v525, %v372
    %vm527 = vcmp.eq.s32.totalorder %v224, 1
    %v528 = vsel %vm527, %v526, %v375
    %v529 = vmax.f32 %v376, %v526
    %v530 = vsub.f32 %v376, %v529
    %v531 = vmul.f32 %v530, 1.442695
    %v532 = vpow.pop %v531
    %v533 = vsub.f32 %v526, %v529
    %v534 = vmul.f32 %v533, 1.442695
    %v535 = vpow.pop %v534
    %v536 = vmul.f32 %v532, %v384
    %v537 = vadd.f32 %v536, %v535
    %v538 = vmul.f32 %v532, %v386
    %v539 = vmul.f32 %v535, %v517
    %v540 = vadd.f32 %v538, %v539
    %v541 = vadd.f32 %v387, %v389
    %s542 = scalar_lea.vmem [#allocation2], 4
    %v543 = vld [vmem:[%s542] sm:$0x3]
    %v544 = vsel %vm226, %v454, 0
    %546 = vmatpush.msra.mxu0 0.0
    %547 = vmatpush.msra.mxu0 0.0
    %548 = vmatpush.msra.mxu0 0.0
    %549 = vmatpush.msra.mxu0 0.0
    %550 = vmatpush.msra.mxu0 0.0
    %551 = vmatpush.msra.mxu0 0.0
    %552 = vmatpush.msra.mxu0 0.0
    %553 = vmatpush.msra.mxu0 0.0
    %554 = vmatpush.msra.mxu0 0.0
    %555 = vmatpush.msra.mxu0 0.0
    %556 = vmatpush.msra.mxu0 0.0
    %557 = vmatpush.msra.mxu0 0.0
    %558 = vmatpush.msra.mxu0 %v203
    %559 = vmatpush.msra.mxu0 %v202
    %560 = vmatpush.msra.mxu0 %v201
    %561 = vmatpush.msra.mxu0 %v200
    %562 = vmatmul.f32.gmra.mxu0 %v544
    %v563 = vpop.f32.mrf.mxu0
    %v564 = vadd.f32 0.0, %v563
    %565 = vdwg.mxu0
    %v566 = vadd.f32 %v543, %v564
    %v567 = vxor.u32 %v566, 2147483648
    %v568 = vmul.f32 %v567, 1.442695
    %v569 = vpow.pop %v568
    %v570 = vadd.f32 %v569, 1.0
    %v571 = vrcp.pop %v570
    %v572 = vmul.f32 %v570, %v571
    %v573 = vsub.f32 1.0, %v572
    %v574 = vmul.f32 %v571, %v573
    %v575 = vadd.f32 %v571, %v574
    %vm576 = vweird.f32 %v570
    %vm577 = vweird.f32 %v571
    %vm578 = vmor %vm576, %vm577
    %v579 = vsel %vm578, %v571, %v575
    %v580 = vand.u32 2147483647, %v570
    %vm581 = vcmp.eq.f32.partialorder %v580, 8.507059e+37
    %v582 = vand.u32 %v570, 2147483648
    %v583 = vor.u32 1.1754944e-38, %v582
    %v584 = vsel %vm581, %v583, %v579
    %v585 = vmul.f32 1.0, %v584
    %v586 = vadd.f32 %v564, %v271
    %588 = vrot.lane.b32.xlu0 %v586, 64
    %v589 = vpop.permute.xlu0 %588
    %v591 = vmul.f32 %v585, %v589
    %593 = vrot.lane.b32.xlu0 %v591, 64
    %v594 = vpop.permute.xlu0 %593
    %v596 = vadd.f32 %v543, %v594
    %v597 = vtanh.pop %v596
    %v598 = vsub.f32 1.0, %v585
    %600 = vrot.lane.b32.xlu0 %v597, 96
    %v601 = vpop.permute.xlu0 %600
    %v603 = vmul.f32 %v598, %v601
    %v604 = vmul.f32 %v585, %v451
    %v605 = vadd.f32 %v603, %v604
    %607 = vrot.lane.b32.xlu0 %v605, 96
    %v608 = vpop.permute.xlu0 %607
    %v610 = vsel %vm226, %v608, %v517
    %v612 = vsel %vm298, %v610, 0
    %614 = vmatpush.msra.mxu0 0.0
    %615 = vmatpush.msra.mxu0 0.0
    %616 = vmatpush.msra.mxu0 0.0
    %617 = vmatpush.msra.mxu0 0.0
    %618 = vmatpush.msra.mxu0 0.0
    %619 = vmatpush.msra.mxu0 0.0
    %620 = vmatpush.msra.mxu0 0.0
    %621 = vmatpush.msra.mxu0 0.0
    %622 = vmatpush.msra.mxu0 %v211
    %623 = vmatpush.msra.mxu0 %v210
    %624 = vmatpush.msra.mxu0 %v209
    %625 = vmatpush.msra.mxu0 %v208
    %626 = vmatpush.msra.mxu0 %v207
    %627 = vmatpush.msra.mxu0 %v206
    %628 = vmatpush.msra.mxu0 %v205
    %629 = vmatpush.msra.mxu0 %v204
    %630 = vmatmul.f32.gmra.mxu0 %v612
    %v631 = vpop.f32.mrf.mxu0
    %v632 = vadd.f32 %v217, %v631
    %633 = vdwg.mxu0
    %v634 = vxor.u32 %v632, 2147483648
    %v635 = vmul.f32 %v634, 1.442695
    %v636 = vpow.pop %v635
    %v637 = vadd.f32 %v636, 1.0
    %v638 = vrcp.pop %v637
    %v639 = vmul.f32 %v637, %v638
    %v640 = vsub.f32 1.0, %v639
    %v641 = vmul.f32 %v638, %v640
    %v642 = vadd.f32 %v638, %v641
    %vm643 = vweird.f32 %v637
    %vm644 = vweird.f32 %v638
    %vm645 = vmor %vm643, %vm644
    %v646 = vsel %vm645, %v638, %v642
    %v647 = vand.u32 2147483647, %v637
    %vm648 = vcmp.eq.f32.partialorder %v647, 8.507059e+37
    %v649 = vand.u32 %v637, 2147483648
    %v650 = vor.u32 1.1754944e-38, %v649
    %v651 = vsel %vm648, %v650, %v646
    %v652 = vmul.f32 1.0, %v651
    %654 = vrot.lane.b32.xlu0 %v632, 32
    %v655 = vpop.permute.xlu0 %654
    %v657 = vmul.f32 %v652, %v655
    %659 = vrot.lane.b32.xlu0 %v657, 64
    %v660 = vpop.permute.xlu0 %659
    %v662 = vadd.f32 %v632, %v660
    %v663 = vtanh.pop %v662
    %v664 = vsub.f32 1.0, %v652
    %666 = vrot.lane.b32.xlu0 %v663, 96
    %v667 = vpop.permute.xlu0 %666
    %v669 = vmul.f32 %v664, %v667
    %v670 = vmul.f32 %v652, %v517
    %v671 = vadd.f32 %v669, %v670
    %v672 = vmul.f32 %v671, %v361
    %674 = vrot.lane.b32.xlu0 %v672, 96
    %v675 = vpop.permute.xlu0 %674
    %v677 = vsel %vm368, %v675, 0.0
    %678 = vadd.xlane.f32.xlu0 %v677
    %v679 = vpop.xlane.xlu0 %678
    %v680 = vadd.f32 %v679, %v372
    %vm681 = vcmp.eq.s32.totalorder %v224, 2
    %v682 = vsel %vm681, %v680, %v528
    %v683 = vmax.f32 %v529, %v680
    %v684 = vsub.f32 %v529, %v683
    %v685 = vmul.f32 %v684, 1.442695
    %v686 = vpow.pop %v685
    %v687 = vsub.f32 %v680, %v683
    %v688 = vmul.f32 %v687, 1.442695
    %v689 = vpow.pop %v688
    %v690 = vmul.f32 %v686, %v537
    %v691 = vadd.f32 %v690, %v689
    %v692 = vmul.f32 %v686, %v540
    %v693 = vmul.f32 %v689, %v671
    %v694 = vadd.f32 %v692, %v693
    %v695 = vadd.f32 %v541, %v543
    %s696 = scalar_lea.vmem [#allocation2], 6
    %v697 = vld [vmem:[%s696] sm:$0x3]
    %v698 = vsel %vm226, %v608, 0
    %700 = vmatpush.msra.mxu0 0.0
    %701 = vmatpush.msra.mxu0 0.0
    %702 = vmatpush.msra.mxu0 0.0
    %703 = vmatpush.msra.mxu0 0.0
    %704 = vmatpush.msra.mxu0 0.0
    %705 = vmatpush.msra.mxu0 0.0
    %706 = vmatpush.msra.mxu0 0.0
    %707 = vmatpush.msra.mxu0 0.0
    %708 = vmatpush.msra.mxu0 0.0
    %709 = vmatpush.msra.mxu0 0.0
    %710 = vmatpush.msra.mxu0 0.0
    %711 = vmatpush.msra.mxu0 0.0
    %712 = vmatpush.msra.mxu0 %v203
    %713 = vmatpush.msra.mxu0 %v202
    %714 = vmatpush.msra.mxu0 %v201
    %715 = vmatpush.msra.mxu0 %v200
    %716 = vmatmul.f32.gmra.mxu0 %v698
    %v717 = vpop.f32.mrf.mxu0
    %v718 = vadd.f32 0.0, %v717
    %719 = vdwg.mxu0
    %v720 = vadd.f32 %v697, %v718
    %v721 = vxor.u32 %v720, 2147483648
    %v722 = vmul.f32 %v721, 1.442695
    %v723 = vpow.pop %v722
    %v724 = vadd.f32 %v723, 1.0
    %v725 = vrcp.pop %v724
    %v726 = vmul.f32 %v724, %v725
    %v727 = vsub.f32 1.0, %v726
    %v728 = vmul.f32 %v725, %v727
    %v729 = vadd.f32 %v725, %v728
    %vm730 = vweird.f32 %v724
    %vm731 = vweird.f32 %v725
    %vm732 = vmor %vm730, %vm731
    %v733 = vsel %vm732, %v725, %v729
    %v734 = vand.u32 2147483647, %v724
    %vm735 = vcmp.eq.f32.partialorder %v734, 8.507059e+37
    %v736 = vand.u32 %v724, 2147483648
    %v737 = vor.u32 1.1754944e-38, %v736
    %v738 = vsel %vm735, %v737, %v733
    %v739 = vmul.f32 1.0, %v738
    %v740 = vadd.f32 %v718, %v271
    %742 = vrot.lane.b32.xlu0 %v740, 64
    %v743 = vpop.permute.xlu0 %742
    %v745 = vmul.f32 %v739, %v743
    %747 = vrot.lane.b32.xlu0 %v745, 64
    %v748 = vpop.permute.xlu0 %747
    %v750 = vadd.f32 %v697, %v748
    %v751 = vtanh.pop %v750
    %v752 = vsub.f32 1.0, %v739
    %754 = vrot.lane.b32.xlu0 %v751, 96
    %v755 = vpop.permute.xlu0 %754
    %v757 = vmul.f32 %v752, %v755
    %v758 = vmul.f32 %v739, %v605
    %v759 = vadd.f32 %v757, %v758
    %761 = vrot.lane.b32.xlu0 %v759, 96
    %v762 = vpop.permute.xlu0 %761
    %v764 = vsel %vm226, %v762, %v671
    %v766 = vsel %vm298, %v764, 0
    %768 = vmatpush.msra.mxu0 0.0
    %769 = vmatpush.msra.mxu0 0.0
    %770 = vmatpush.msra.mxu0 0.0
    %771 = vmatpush.msra.mxu0 0.0
    %772 = vmatpush.msra.mxu0 0.0
    %773 = vmatpush.msra.mxu0 0.0
    %774 = vmatpush.msra.mxu0 0.0
    %775 = vmatpush.msra.mxu0 0.0
    %776 = vmatpush.msra.mxu0 %v211
    %777 = vmatpush.msra.mxu0 %v210
    %778 = vmatpush.msra.mxu0 %v209
    %779 = vmatpush.msra.mxu0 %v208
    %780 = vmatpush.msra.mxu0 %v207
    %781 = vmatpush.msra.mxu0 %v206
    %782 = vmatpush.msra.mxu0 %v205
    %783 = vmatpush.msra.mxu0 %v204
    %784 = vmatmul.f32.gmra.mxu0 %v766
    %v785 = vpop.f32.mrf.mxu0
    %v786 = vadd.f32 %v217, %v785
    %787 = vdwg.mxu0
    %v788 = vxor.u32 %v786, 2147483648
    %v789 = vmul.f32 %v788, 1.442695
    %v790 = vpow.pop %v789
    %v791 = vadd.f32 %v790, 1.0
    %v792 = vrcp.pop %v791
    %v793 = vmul.f32 %v791, %v792
    %v794 = vsub.f32 1.0, %v793
    %v795 = vmul.f32 %v792, %v794
    %v796 = vadd.f32 %v792, %v795
    %vm797 = vweird.f32 %v791
    %vm798 = vweird.f32 %v792
    %vm799 = vmor %vm797, %vm798
    %v800 = vsel %vm799, %v792, %v796
    %v801 = vand.u32 2147483647, %v791
    %vm802 = vcmp.eq.f32.partialorder %v801, 8.507059e+37
    %v803 = vand.u32 %v791, 2147483648
    %v804 = vor.u32 1.1754944e-38, %v803
    %v805 = vsel %vm802, %v804, %v800
    %v806 = vmul.f32 1.0, %v805
    %808 = vrot.lane.b32.xlu0 %v786, 32
    %v809 = vpop.permute.xlu0 %808
    %v811 = vmul.f32 %v806, %v809
    %813 = vrot.lane.b32.xlu0 %v811, 64
    %v814 = vpop.permute.xlu0 %813
    %v816 = vadd.f32 %v786, %v814
    %v817 = vtanh.pop %v816
    %v818 = vsub.f32 1.0, %v806
    %820 = vrot.lane.b32.xlu0 %v817, 96
    %v821 = vpop.permute.xlu0 %820
    %v823 = vmul.f32 %v818, %v821
    %v824 = vmul.f32 %v806, %v671
    %v825 = vadd.f32 %v823, %v824
    %v826 = vmul.f32 %v825, %v361
    %828 = vrot.lane.b32.xlu0 %v826, 96
    %v829 = vpop.permute.xlu0 %828
    %v831 = vsel %vm368, %v829, 0.0
    %832 = vadd.xlane.f32.xlu0 %v831
    %v833 = vpop.xlane.xlu0 %832
    %v834 = vadd.f32 %v833, %v372
    %vm835 = vcmp.eq.s32.totalorder %v224, 3
    %v836 = vsel %vm835, %v834, %v682
    %v837 = vmax.f32 %v683, %v834
    %v838 = vsub.f32 %v683, %v837
    %v839 = vmul.f32 %v838, 1.442695
    %v840 = vpow.pop %v839
    %v841 = vsub.f32 %v834, %v837
    %v842 = vmul.f32 %v841, 1.442695
    %v843 = vpow.pop %v842
    %v844 = vmul.f32 %v840, %v691
    %v845 = vadd.f32 %v844, %v843
    %v846 = vmul.f32 %v840, %v694
    %v847 = vmul.f32 %v843, %v825
    %v848 = vadd.f32 %v846, %v847
    %v849 = vadd.f32 %v695, %v697
    %s850 = scalar_lea.vmem [#allocation2], 8
    %v851 = vld [vmem:[%s850] sm:$0x3]
    %v852 = vsel %vm226, %v762, 0
    %854 = vmatpush.msra.mxu0 0.0
    %855 = vmatpush.msra.mxu0 0.0
    %856 = vmatpush.msra.mxu0 0.0
    %857 = vmatpush.msra.mxu0 0.0
    %858 = vmatpush.msra.mxu0 0.0
    %859 = vmatpush.msra.mxu0 0.0
    %860 = vmatpush.msra.mxu0 0.0
    %861 = vmatpush.msra.mxu0 0.0
    %862 = vmatpush.msra.mxu0 0.0
    %863 = vmatpush.msra.mxu0 0.0
    %864 = vmatpush.msra.mxu0 0.0
    %865 = vmatpush.msra.mxu0 0.0
    %866 = vmatpush.msra.mxu0 %v203
    %867 = vmatpush.msra.mxu0 %v202
    %868 = vmatpush.msra.mxu0 %v201
    %869 = vmatpush.msra.mxu0 %v200
    %870 = vmatmul.f32.gmra.mxu0 %v852
    %v871 = vpop.f32.mrf.mxu0
    %v872 = vadd.f32 0.0, %v871
    %873 = vdwg.mxu0
    %v874 = vadd.f32 %v851, %v872
    %v875 = vxor.u32 %v874, 2147483648
    %v876 = vmul.f32 %v875, 1.442695
    %v877 = vpow.pop %v876
    %v878 = vadd.f32 %v877, 1.0
    %v879 = vrcp.pop %v878
    %v880 = vmul.f32 %v878, %v879
    %v881 = vsub.f32 1.0, %v880
    %v882 = vmul.f32 %v879, %v881
    %v883 = vadd.f32 %v879, %v882
    %vm884 = vweird.f32 %v878
    %vm885 = vweird.f32 %v879
    %vm886 = vmor %vm884, %vm885
    %v887 = vsel %vm886, %v879, %v883
    %v888 = vand.u32 2147483647, %v878
    %vm889 = vcmp.eq.f32.partialorder %v888, 8.507059e+37
    %v890 = vand.u32 %v878, 2147483648
    %v891 = vor.u32 1.1754944e-38, %v890
    %v892 = vsel %vm889, %v891, %v887
    %v893 = vmul.f32 1.0, %v892
    %v894 = vadd.f32 %v872, %v271
    %896 = vrot.lane.b32.xlu0 %v894, 64
    %v897 = vpop.permute.xlu0 %896
    %v899 = vmul.f32 %v893, %v897
    %901 = vrot.lane.b32.xlu0 %v899, 64
    %v902 = vpop.permute.xlu0 %901
    %v904 = vadd.f32 %v851, %v902
    %v905 = vtanh.pop %v904
    %v906 = vsub.f32 1.0, %v893
    %908 = vrot.lane.b32.xlu0 %v905, 96
    %v909 = vpop.permute.xlu0 %908
    %v911 = vmul.f32 %v906, %v909
    %v912 = vmul.f32 %v893, %v759
    %v913 = vadd.f32 %v911, %v912
    %915 = vrot.lane.b32.xlu0 %v913, 96
    %v916 = vpop.permute.xlu0 %915
    %v918 = vsel %vm226, %v916, %v825
    %v920 = vsel %vm298, %v918, 0
    %922 = vmatpush.msra.mxu0 0.0
    %923 = vmatpush.msra.mxu0 0.0
    %924 = vmatpush.msra.mxu0 0.0
    %925 = vmatpush.msra.mxu0 0.0
    %926 = vmatpush.msra.mxu0 0.0
    %927 = vmatpush.msra.mxu0 0.0
    %928 = vmatpush.msra.mxu0 0.0
    %929 = vmatpush.msra.mxu0 0.0
    %930 = vmatpush.msra.mxu0 %v211
    %931 = vmatpush.msra.mxu0 %v210
    %932 = vmatpush.msra.mxu0 %v209
    %933 = vmatpush.msra.mxu0 %v208
    %934 = vmatpush.msra.mxu0 %v207
    %935 = vmatpush.msra.mxu0 %v206
    %936 = vmatpush.msra.mxu0 %v205
    %937 = vmatpush.msra.mxu0 %v204
    %938 = vmatmul.f32.gmra.mxu0 %v920
    %v939 = vpop.f32.mrf.mxu0
    %v940 = vadd.f32 %v217, %v939
    %941 = vdwg.mxu0
    %v942 = vxor.u32 %v940, 2147483648
    %v943 = vmul.f32 %v942, 1.442695
    %v944 = vpow.pop %v943
    %v945 = vadd.f32 %v944, 1.0
    %v946 = vrcp.pop %v945
    %v947 = vmul.f32 %v945, %v946
    %v948 = vsub.f32 1.0, %v947
    %v949 = vmul.f32 %v946, %v948
    %v950 = vadd.f32 %v946, %v949
    %vm951 = vweird.f32 %v945
    %vm952 = vweird.f32 %v946
    %vm953 = vmor %vm951, %vm952
    %v954 = vsel %vm953, %v946, %v950
    %v955 = vand.u32 2147483647, %v945
    %vm956 = vcmp.eq.f32.partialorder %v955, 8.507059e+37
    %v957 = vand.u32 %v945, 2147483648
    %v958 = vor.u32 1.1754944e-38, %v957
    %v959 = vsel %vm956, %v958, %v954
    %v960 = vmul.f32 1.0, %v959
    %962 = vrot.lane.b32.xlu0 %v940, 32
    %v963 = vpop.permute.xlu0 %962
    %v965 = vmul.f32 %v960, %v963
    %967 = vrot.lane.b32.xlu0 %v965, 64
    %v968 = vpop.permute.xlu0 %967
    %v970 = vadd.f32 %v940, %v968
    %v971 = vtanh.pop %v970
    %v972 = vsub.f32 1.0, %v960
    %974 = vrot.lane.b32.xlu0 %v971, 96
    %v975 = vpop.permute.xlu0 %974
    %v977 = vmul.f32 %v972, %v975
    %v978 = vmul.f32 %v960, %v825
    %v979 = vadd.f32 %v977, %v978
    %v980 = vmul.f32 %v979, %v361
    %982 = vrot.lane.b32.xlu0 %v980, 96
    %v983 = vpop.permute.xlu0 %982
    %v985 = vsel %vm368, %v983, 0.0
    %986 = vadd.xlane.f32.xlu0 %v985
    %v987 = vpop.xlane.xlu0 %986
    %v988 = vadd.f32 %v987, %v372
    %vm989 = vcmp.eq.s32.totalorder %v224, 4
    %v990 = vsel %vm989, %v988, %v836
    %v991 = vmax.f32 %v837, %v988
    %v992 = vsub.f32 %v837, %v991
    %v993 = vmul.f32 %v992, 1.442695
    %v994 = vpow.pop %v993
    %v995 = vsub.f32 %v988, %v991
    %v996 = vmul.f32 %v995, 1.442695
    %v997 = vpow.pop %v996
    %v998 = vmul.f32 %v994, %v845
    %v999 = vadd.f32 %v998, %v997
    %v1000 = vmul.f32 %v994, %v848
    %v1001 = vmul.f32 %v997, %v979
    %v1002 = vadd.f32 %v1000, %v1001
    %v1003 = vadd.f32 %v849, %v851
    %s1004 = scalar_lea.vmem [#allocation2], 10
    %v1005 = vld [vmem:[%s1004] sm:$0x3]
    %v1006 = vsel %vm226, %v916, 0
    %1008 = vmatpush.msra.mxu0 0.0
    %1009 = vmatpush.msra.mxu0 0.0
    %1010 = vmatpush.msra.mxu0 0.0
    %1011 = vmatpush.msra.mxu0 0.0
    %1012 = vmatpush.msra.mxu0 0.0
    %1013 = vmatpush.msra.mxu0 0.0
    %1014 = vmatpush.msra.mxu0 0.0
    %1015 = vmatpush.msra.mxu0 0.0
    %1016 = vmatpush.msra.mxu0 0.0
    %1017 = vmatpush.msra.mxu0 0.0
    %1018 = vmatpush.msra.mxu0 0.0
    %1019 = vmatpush.msra.mxu0 0.0
    %1020 = vmatpush.msra.mxu0 %v203
    %1021 = vmatpush.msra.mxu0 %v202
    %1022 = vmatpush.msra.mxu0 %v201
    %1023 = vmatpush.msra.mxu0 %v200
    %1024 = vmatmul.f32.gmra.mxu0 %v1006
    %v1025 = vpop.f32.mrf.mxu0
    %v1026 = vadd.f32 0.0, %v1025
    %1027 = vdwg.mxu0
    %v1028 = vadd.f32 %v1005, %v1026
    %v1029 = vxor.u32 %v1028, 2147483648
    %v1030 = vmul.f32 %v1029, 1.442695
    %v1031 = vpow.pop %v1030
    %v1032 = vadd.f32 %v1031, 1.0
    %v1033 = vrcp.pop %v1032
    %v1034 = vmul.f32 %v1032, %v1033
    %v1035 = vsub.f32 1.0, %v1034
    %v1036 = vmul.f32 %v1033, %v1035
    %v1037 = vadd.f32 %v1033, %v1036
    %vm1038 = vweird.f32 %v1032
    %vm1039 = vweird.f32 %v1033
    %vm1040 = vmor %vm1038, %vm1039
    %v1041 = vsel %vm1040, %v1033, %v1037
    %v1042 = vand.u32 2147483647, %v1032
    %vm1043 = vcmp.eq.f32.partialorder %v1042, 8.507059e+37
    %v1044 = vand.u32 %v1032, 2147483648
    %v1045 = vor.u32 1.1754944e-38, %v1044
    %v1046 = vsel %vm1043, %v1045, %v1041
    %v1047 = vmul.f32 1.0, %v1046
    %v1048 = vadd.f32 %v1026, %v271
    %1050 = vrot.lane.b32.xlu0 %v1048, 64
    %v1051 = vpop.permute.xlu0 %1050
    %v1053 = vmul.f32 %v1047, %v1051
    %1055 = vrot.lane.b32.xlu0 %v1053, 64
    %v1056 = vpop.permute.xlu0 %1055
    %v1058 = vadd.f32 %v1005, %v1056
    %v1059 = vtanh.pop %v1058
    %v1060 = vsub.f32 1.0, %v1047
    %1062 = vrot.lane.b32.xlu0 %v1059, 96
    %v1063 = vpop.permute.xlu0 %1062
    %v1065 = vmul.f32 %v1060, %v1063
    %v1066 = vmul.f32 %v1047, %v913
    %v1067 = vadd.f32 %v1065, %v1066
    %1069 = vrot.lane.b32.xlu0 %v1067, 96
    %v1070 = vpop.permute.xlu0 %1069
    %v1072 = vsel %vm226, %v1070, %v979
    %v1074 = vsel %vm298, %v1072, 0
    %1076 = vmatpush.msra.mxu0 0.0
    %1077 = vmatpush.msra.mxu0 0.0
    %1078 = vmatpush.msra.mxu0 0.0
    %1079 = vmatpush.msra.mxu0 0.0
    %1080 = vmatpush.msra.mxu0 0.0
    %1081 = vmatpush.msra.mxu0 0.0
    %1082 = vmatpush.msra.mxu0 0.0
    %1083 = vmatpush.msra.mxu0 0.0
    %1084 = vmatpush.msra.mxu0 %v211
    %1085 = vmatpush.msra.mxu0 %v210
    %1086 = vmatpush.msra.mxu0 %v209
    %1087 = vmatpush.msra.mxu0 %v208
    %1088 = vmatpush.msra.mxu0 %v207
    %1089 = vmatpush.msra.mxu0 %v206
    %1090 = vmatpush.msra.mxu0 %v205
    %1091 = vmatpush.msra.mxu0 %v204
    %1092 = vmatmul.f32.gmra.mxu0 %v1074
    %v1093 = vpop.f32.mrf.mxu0
    %v1094 = vadd.f32 %v217, %v1093
    %1095 = vdwg.mxu0
    %v1096 = vxor.u32 %v1094, 2147483648
    %v1097 = vmul.f32 %v1096, 1.442695
    %v1098 = vpow.pop %v1097
    %v1099 = vadd.f32 %v1098, 1.0
    %v1100 = vrcp.pop %v1099
    %v1101 = vmul.f32 %v1099, %v1100
    %v1102 = vsub.f32 1.0, %v1101
    %v1103 = vmul.f32 %v1100, %v1102
    %v1104 = vadd.f32 %v1100, %v1103
    %vm1105 = vweird.f32 %v1099
    %vm1106 = vweird.f32 %v1100
    %vm1107 = vmor %vm1105, %vm1106
    %v1108 = vsel %vm1107, %v1100, %v1104
    %v1109 = vand.u32 2147483647, %v1099
    %vm1110 = vcmp.eq.f32.partialorder %v1109, 8.507059e+37
    %v1111 = vand.u32 %v1099, 2147483648
    %v1112 = vor.u32 1.1754944e-38, %v1111
    %v1113 = vsel %vm1110, %v1112, %v1108
    %v1114 = vmul.f32 1.0, %v1113
    %1116 = vrot.lane.b32.xlu0 %v1094, 32
    %v1117 = vpop.permute.xlu0 %1116
    %v1119 = vmul.f32 %v1114, %v1117
    %1121 = vrot.lane.b32.xlu0 %v1119, 64
    %v1122 = vpop.permute.xlu0 %1121
    %v1124 = vadd.f32 %v1094, %v1122
    %v1125 = vtanh.pop %v1124
    %v1126 = vsub.f32 1.0, %v1114
    %1128 = vrot.lane.b32.xlu0 %v1125, 96
    %v1129 = vpop.permute.xlu0 %1128
    %v1131 = vmul.f32 %v1126, %v1129
    %v1132 = vmul.f32 %v1114, %v979
    %v1133 = vadd.f32 %v1131, %v1132
    %v1134 = vmul.f32 %v1133, %v361
    %1136 = vrot.lane.b32.xlu0 %v1134, 96
    %v1137 = vpop.permute.xlu0 %1136
    %v1139 = vsel %vm368, %v1137, 0.0
    %1140 = vadd.xlane.f32.xlu0 %v1139
    %v1141 = vpop.xlane.xlu0 %1140
    %v1142 = vadd.f32 %v1141, %v372
    %vm1143 = vcmp.eq.s32.totalorder %v224, 5
    %v1144 = vsel %vm1143, %v1142, %v990
    %v1145 = vmax.f32 %v991, %v1142
    %v1146 = vsub.f32 %v991, %v1145
    %v1147 = vmul.f32 %v1146, 1.442695
    %v1148 = vpow.pop %v1147
    %v1149 = vsub.f32 %v1142, %v1145
    %v1150 = vmul.f32 %v1149, 1.442695
    %v1151 = vpow.pop %v1150
    %v1152 = vmul.f32 %v1148, %v999
    %v1153 = vadd.f32 %v1152, %v1151
    %v1154 = vmul.f32 %v1148, %v1002
    %v1155 = vmul.f32 %v1151, %v1133
    %v1156 = vadd.f32 %v1154, %v1155
    %v1157 = vadd.f32 %v1003, %v1005
    %s1158 = scalar_lea.vmem [#allocation2], 12
    %v1159 = vld [vmem:[%s1158] sm:$0x3]
    %v1160 = vsel %vm226, %v1070, 0
    %1162 = vmatpush.msra.mxu0 0.0
    %1163 = vmatpush.msra.mxu0 0.0
    %1164 = vmatpush.msra.mxu0 0.0
    %1165 = vmatpush.msra.mxu0 0.0
    %1166 = vmatpush.msra.mxu0 0.0
    %1167 = vmatpush.msra.mxu0 0.0
    %1168 = vmatpush.msra.mxu0 0.0
    %1169 = vmatpush.msra.mxu0 0.0
    %1170 = vmatpush.msra.mxu0 0.0
    %1171 = vmatpush.msra.mxu0 0.0
    %1172 = vmatpush.msra.mxu0 0.0
    %1173 = vmatpush.msra.mxu0 0.0
    %1174 = vmatpush.msra.mxu0 %v203
    %1175 = vmatpush.msra.mxu0 %v202
    %1176 = vmatpush.msra.mxu0 %v201
    %1177 = vmatpush.msra.mxu0 %v200
    %1178 = vmatmul.f32.gmra.mxu0 %v1160
    %v1179 = vpop.f32.mrf.mxu0
    %v1180 = vadd.f32 0.0, %v1179
    %1181 = vdwg.mxu0
    %v1182 = vadd.f32 %v1159, %v1180
    %v1183 = vxor.u32 %v1182, 2147483648
    %v1184 = vmul.f32 %v1183, 1.442695
    %v1185 = vpow.pop %v1184
    %v1186 = vadd.f32 %v1185, 1.0
    %v1187 = vrcp.pop %v1186
    %v1188 = vmul.f32 %v1186, %v1187
    %v1189 = vsub.f32 1.0, %v1188
    %v1190 = vmul.f32 %v1187, %v1189
    %v1191 = vadd.f32 %v1187, %v1190
    %vm1192 = vweird.f32 %v1186
    %vm1193 = vweird.f32 %v1187
    %vm1194 = vmor %vm1192, %vm1193
    %v1195 = vsel %vm1194, %v1187, %v1191
    %v1196 = vand.u32 2147483647, %v1186
    %vm1197 = vcmp.eq.f32.partialorder %v1196, 8.507059e+37
    %v1198 = vand.u32 %v1186, 2147483648
    %v1199 = vor.u32 1.1754944e-38, %v1198
    %v1200 = vsel %vm1197, %v1199, %v1195
    %v1201 = vmul.f32 1.0, %v1200
    %v1202 = vadd.f32 %v1180, %v271
    %1204 = vrot.lane.b32.xlu0 %v1202, 64
    %v1205 = vpop.permute.xlu0 %1204
    %v1207 = vmul.f32 %v1201, %v1205
    %1209 = vrot.lane.b32.xlu0 %v1207, 64
    %v1210 = vpop.permute.xlu0 %1209
    %v1212 = vadd.f32 %v1159, %v1210
    %v1213 = vtanh.pop %v1212
    %v1214 = vsub.f32 1.0, %v1201
    %1216 = vrot.lane.b32.xlu0 %v1213, 96
    %v1217 = vpop.permute.xlu0 %1216
    %v1219 = vmul.f32 %v1214, %v1217
    %v1220 = vmul.f32 %v1201, %v1067
    %v1221 = vadd.f32 %v1219, %v1220
    %1223 = vrot.lane.b32.xlu0 %v1221, 96
    %v1224 = vpop.permute.xlu0 %1223
    %v1226 = vsel %vm226, %v1224, %v1133
    %v1228 = vsel %vm298, %v1226, 0
    %1230 = vmatpush.msra.mxu0 0.0
    %1231 = vmatpush.msra.mxu0 0.0
    %1232 = vmatpush.msra.mxu0 0.0
    %1233 = vmatpush.msra.mxu0 0.0
    %1234 = vmatpush.msra.mxu0 0.0
    %1235 = vmatpush.msra.mxu0 0.0
    %1236 = vmatpush.msra.mxu0 0.0
    %1237 = vmatpush.msra.mxu0 0.0
    %1238 = vmatpush.msra.mxu0 %v211
    %1239 = vmatpush.msra.mxu0 %v210
    %1240 = vmatpush.msra.mxu0 %v209
    %1241 = vmatpush.msra.mxu0 %v208
    %1242 = vmatpush.msra.mxu0 %v207
    %1243 = vmatpush.msra.mxu0 %v206
    %1244 = vmatpush.msra.mxu0 %v205
    %1245 = vmatpush.msra.mxu0 %v204
    %1246 = vmatmul.f32.gmra.mxu0 %v1228
    %v1247 = vpop.f32.mrf.mxu0
    %v1248 = vadd.f32 %v217, %v1247
    %1249 = vdwg.mxu0
    %v1250 = vxor.u32 %v1248, 2147483648
    %v1251 = vmul.f32 %v1250, 1.442695
    %v1252 = vpow.pop %v1251
    %v1253 = vadd.f32 %v1252, 1.0
    %v1254 = vrcp.pop %v1253
    %v1255 = vmul.f32 %v1253, %v1254
    %v1256 = vsub.f32 1.0, %v1255
    %v1257 = vmul.f32 %v1254, %v1256
    %v1258 = vadd.f32 %v1254, %v1257
    %vm1259 = vweird.f32 %v1253
    %vm1260 = vweird.f32 %v1254
    %vm1261 = vmor %vm1259, %vm1260
    %v1262 = vsel %vm1261, %v1254, %v1258
    %v1263 = vand.u32 2147483647, %v1253
    %vm1264 = vcmp.eq.f32.partialorder %v1263, 8.507059e+37
    %v1265 = vand.u32 %v1253, 2147483648
    %v1266 = vor.u32 1.1754944e-38, %v1265
    %v1267 = vsel %vm1264, %v1266, %v1262
    %v1268 = vmul.f32 1.0, %v1267
    %1270 = vrot.lane.b32.xlu0 %v1248, 32
    %v1271 = vpop.permute.xlu0 %1270
    %v1273 = vmul.f32 %v1268, %v1271
    %1275 = vrot.lane.b32.xlu0 %v1273, 64
    %v1276 = vpop.permute.xlu0 %1275
    %v1278 = vadd.f32 %v1248, %v1276
    %v1279 = vtanh.pop %v1278
    %v1280 = vsub.f32 1.0, %v1268
    %1282 = vrot.lane.b32.xlu0 %v1279, 96
    %v1283 = vpop.permute.xlu0 %1282
    %v1285 = vmul.f32 %v1280, %v1283
    %v1286 = vmul.f32 %v1268, %v1133
    %v1287 = vadd.f32 %v1285, %v1286
    %v1288 = vmul.f32 %v1287, %v361
    %1290 = vrot.lane.b32.xlu0 %v1288, 96
    %v1291 = vpop.permute.xlu0 %1290
    %v1293 = vsel %vm368, %v1291, 0.0
    %1294 = vadd.xlane.f32.xlu0 %v1293
    %v1295 = vpop.xlane.xlu0 %1294
    %v1296 = vadd.f32 %v1295, %v372
    %vm1297 = vcmp.eq.s32.totalorder %v224, 6
    %v1298 = vsel %vm1297, %v1296, %v1144
    %v1299 = vmax.f32 %v1145, %v1296
    %v1300 = vsub.f32 %v1145, %v1299
    %v1301 = vmul.f32 %v1300, 1.442695
    %v1302 = vpow.pop %v1301
    %v1303 = vsub.f32 %v1296, %v1299
    %v1304 = vmul.f32 %v1303, 1.442695
    %v1305 = vpow.pop %v1304
    %v1306 = vmul.f32 %v1302, %v1153
    %v1307 = vadd.f32 %v1306, %v1305
    %v1308 = vmul.f32 %v1302, %v1156
    %v1309 = vmul.f32 %v1305, %v1287
    %v1310 = vadd.f32 %v1308, %v1309
    %v1311 = vadd.f32 %v1157, %v1159
    %s1312 = scalar_lea.vmem [#allocation2], 14
    %v1313 = vld [vmem:[%s1312] sm:$0x3]
    %v1314 = vsel %vm226, %v1224, 0
    %1316 = vmatpush.msra.mxu0 0.0
    %1317 = vmatpush.msra.mxu0 0.0
    %1318 = vmatpush.msra.mxu0 0.0
    %1319 = vmatpush.msra.mxu0 0.0
    %1320 = vmatpush.msra.mxu0 0.0
    %1321 = vmatpush.msra.mxu0 0.0
    %1322 = vmatpush.msra.mxu0 0.0
    %1323 = vmatpush.msra.mxu0 0.0
    %1324 = vmatpush.msra.mxu0 0.0
    %1325 = vmatpush.msra.mxu0 0.0
    %1326 = vmatpush.msra.mxu0 0.0
    %1327 = vmatpush.msra.mxu0 0.0
    %1328 = vmatpush.msra.mxu0 %v203
    %1329 = vmatpush.msra.mxu0 %v202
    %1330 = vmatpush.msra.mxu0 %v201
    %1331 = vmatpush.msra.mxu0 %v200
    %1332 = vmatmul.f32.gmra.mxu0 %v1314
    %v1333 = vpop.f32.mrf.mxu0
    %v1334 = vadd.f32 0.0, %v1333
    %1335 = vdwg.mxu0
    %v1336 = vadd.f32 %v1313, %v1334
    %v1337 = vxor.u32 %v1336, 2147483648
    %v1338 = vmul.f32 %v1337, 1.442695
    %v1339 = vpow.pop %v1338
    %v1340 = vadd.f32 %v1339, 1.0
    %v1341 = vrcp.pop %v1340
    %v1342 = vmul.f32 %v1340, %v1341
    %v1343 = vsub.f32 1.0, %v1342
    %v1344 = vmul.f32 %v1341, %v1343
    %v1345 = vadd.f32 %v1341, %v1344
    %vm1346 = vweird.f32 %v1340
    %vm1347 = vweird.f32 %v1341
    %vm1348 = vmor %vm1346, %vm1347
    %v1349 = vsel %vm1348, %v1341, %v1345
    %v1350 = vand.u32 2147483647, %v1340
    %vm1351 = vcmp.eq.f32.partialorder %v1350, 8.507059e+37
    %v1352 = vand.u32 %v1340, 2147483648
    %v1353 = vor.u32 1.1754944e-38, %v1352
    %v1354 = vsel %vm1351, %v1353, %v1349
    %v1355 = vmul.f32 1.0, %v1354
    %v1356 = vadd.f32 %v1334, %v271
    %1358 = vrot.lane.b32.xlu0 %v1356, 64
    %v1359 = vpop.permute.xlu0 %1358
    %v1361 = vmul.f32 %v1355, %v1359
    %1363 = vrot.lane.b32.xlu0 %v1361, 64
    %v1364 = vpop.permute.xlu0 %1363
    %v1366 = vadd.f32 %v1313, %v1364
    %v1367 = vtanh.pop %v1366
    %v1368 = vsub.f32 1.0, %v1355
    %1370 = vrot.lane.b32.xlu0 %v1367, 96
    %v1371 = vpop.permute.xlu0 %1370
    %v1373 = vmul.f32 %v1368, %v1371
    %v1374 = vmul.f32 %v1355, %v1221
    %v1375 = vadd.f32 %v1373, %v1374
    %1377 = vrot.lane.b32.xlu0 %v1375, 96
    %v1378 = vpop.permute.xlu0 %1377
    %v1380 = vsel %vm226, %v1378, %v1287
    %v1382 = vsel %vm298, %v1380, 0
    %1384 = vmatpush.msra.mxu0 0.0
    %1385 = vmatpush.msra.mxu0 0.0
    %1386 = vmatpush.msra.mxu0 0.0
    %1387 = vmatpush.msra.mxu0 0.0
    %1388 = vmatpush.msra.mxu0 0.0
    %1389 = vmatpush.msra.mxu0 0.0
    %1390 = vmatpush.msra.mxu0 0.0
    %1391 = vmatpush.msra.mxu0 0.0
    %1392 = vmatpush.msra.mxu0 %v211
    %1393 = vmatpush.msra.mxu0 %v210
    %1394 = vmatpush.msra.mxu0 %v209
    %1395 = vmatpush.msra.mxu0 %v208
    %1396 = vmatpush.msra.mxu0 %v207
    %1397 = vmatpush.msra.mxu0 %v206
    %1398 = vmatpush.msra.mxu0 %v205
    %1399 = vmatpush.msra.mxu0 %v204
    %1400 = vmatmul.f32.gmra.mxu0 %v1382
    %v1401 = vpop.f32.mrf.mxu0
    %v1402 = vadd.f32 %v217, %v1401
    %1403 = vdwg.mxu0
    %v1404 = vxor.u32 %v1402, 2147483648
    %v1405 = vmul.f32 %v1404, 1.442695
    %v1406 = vpow.pop %v1405
    %v1407 = vadd.f32 %v1406, 1.0
    %v1408 = vrcp.pop %v1407
    %v1409 = vmul.f32 %v1407, %v1408
    %v1410 = vsub.f32 1.0, %v1409
    %v1411 = vmul.f32 %v1408, %v1410
    %v1412 = vadd.f32 %v1408, %v1411
    %vm1413 = vweird.f32 %v1407
    %vm1414 = vweird.f32 %v1408
    %vm1415 = vmor %vm1413, %vm1414
    %v1416 = vsel %vm1415, %v1408, %v1412
    %v1417 = vand.u32 2147483647, %v1407
    %vm1418 = vcmp.eq.f32.partialorder %v1417, 8.507059e+37
    %v1419 = vand.u32 %v1407, 2147483648
    %v1420 = vor.u32 1.1754944e-38, %v1419
    %v1421 = vsel %vm1418, %v1420, %v1416
    %v1422 = vmul.f32 1.0, %v1421
    %1424 = vrot.lane.b32.xlu0 %v1402, 32
    %v1425 = vpop.permute.xlu0 %1424
    %v1427 = vmul.f32 %v1422, %v1425
    %1429 = vrot.lane.b32.xlu0 %v1427, 64
    %v1430 = vpop.permute.xlu0 %1429
    %v1432 = vadd.f32 %v1402, %v1430
    %v1433 = vtanh.pop %v1432
    %v1434 = vsub.f32 1.0, %v1422
    %1436 = vrot.lane.b32.xlu0 %v1433, 96
    %v1437 = vpop.permute.xlu0 %1436
    %v1439 = vmul.f32 %v1434, %v1437
    %v1440 = vmul.f32 %v1422, %v1287
    %v1441 = vadd.f32 %v1439, %v1440
    %v1442 = vmul.f32 %v1441, %v361
    %1444 = vrot.lane.b32.xlu0 %v1442, 96
    %v1445 = vpop.permute.xlu0 %1444
    %v1447 = vsel %vm368, %v1445, 0.0
    %1448 = vadd.xlane.f32.xlu0 %v1447
    %v1449 = vpop.xlane.xlu0 %1448
    %v1450 = vadd.f32 %v1449, %v372
    %vm1451 = vcmp.eq.s32.totalorder %v224, 7
    %v1452 = vsel %vm1451, %v1450, %v1298
    %v1453 = vmax.f32 %v1299, %v1450
    %v1454 = vsub.f32 %v1299, %v1453
    %v1455 = vmul.f32 %v1454, 1.442695
    %v1456 = vpow.pop %v1455
    %v1457 = vsub.f32 %v1450, %v1453
    %v1458 = vmul.f32 %v1457, 1.442695
    %v1459 = vpow.pop %v1458
    %v1460 = vmul.f32 %v1456, %v1307
    %v1461 = vadd.f32 %v1460, %v1459
    %v1462 = vmul.f32 %v1456, %v1310
    %v1463 = vmul.f32 %v1459, %v1441
    %v1464 = vadd.f32 %v1462, %v1463
    %v1465 = vadd.f32 %v1311, %v1313
    %v1466 = vrcp.pop %v1461
    %v1467 = vsub.f32 %v1452, %v1453
    %v1468 = vmul.f32 %v1467, 1.442695
    %v1469 = vpow.pop %v1468
    %v1470 = vmul.f32 %v1469, %v1466
    %vm1471 = vcmask 58368
    %1472 = vst.msk [vmem:[#allocation19] sm:$0x3] %vm1471, %v1470
    %v1473 = vmul.f32 %v1464, %v1466
    %v1474 = vmul.f32 %v1465, 0.125
    %1476 = vrot.lane.b32.xlu0 %v1474, 64
    %v1477 = vpop.permute.xlu0 %1476
    %v1479 = vadd.f32 %v1473, %v1477
    %1481 = vrot.lane.b32.xlu0 %v1479, 96
    %v1482 = vpop.permute.xlu0 %1481
    %v1484 = vsel %vm368, %v1482, 0.0
    %1485 = vadd.xlane.f32.xlu0 %v1484
    %v1486 = vpop.xlane.xlu0 %1485
    %v1487 = vrcp.pop 32.0
    %v1488 = vmul.f32 32.0, %v1487
    %v1489 = vsub.f32 1.0, %v1488
    %v1490 = vmul.f32 %v1487, %v1489
    %v1491 = vadd.f32 %v1487, %v1490
    %vm1492 = vweird.f32 %v1487
    %v1493 = vsel %vm1492, %v1487, %v1491
    %v1494 = vmul.f32 %v1486, %v1493
    %v1495 = vsub.f32 %v1479, %v1494
    %v1496 = vmul.f32 %v1495, %v1495
    %1498 = vrot.lane.b32.xlu0 %v1496, 96
    %v1499 = vpop.permute.xlu0 %1498
    %v1501 = vsel %vm368, %v1499, 0.0
    %1502 = vadd.xlane.f32.xlu0 %v1501
    %v1503 = vpop.xlane.xlu0 %1502
    %v1504 = vmul.f32 %v1503, %v1493
    %v1505 = vadd.f32 %v1504, 1e-05
    %v1506 = vrsqrt.pop %v1505
    %v1507 = vmul.f32 %v1506, %v1505
    %v1508 = vmul.f32 %v1507, %v1506
    %v1509 = vmul.f32 0.5, %v1508
    %v1510 = vsub.f32 1.5, %v1509
    %v1511 = vmul.f32 %v1506, %v1510
    %vm1512 = vweird.f32 %v1505
    %vm1513 = vweird.f32 %v1506
    %vm1514 = vmor %vm1512, %vm1513
    %v1515 = vsel %vm1514, %v1506, %v1511
    %v1516 = vmul.f32 %v1495, %v1515
    %v1517 = vld [vmem:[#allocation13] sm:$0x1]
    %v1519 = vperm.slane %v1517, 0
    %1520 = vrot.lane.b32.xlu0 %v1519, 32
    %v1521 = vpop.permute.xlu0 %1520
    %v1523 = vmul.f32 %v1516, %v1521
    %v1524 = vld [vmem:[#allocation15] sm:$0x1]
    %v1526 = vperm.slane %v1524, 0
    %1527 = vrot.lane.b32.xlu0 %v1526, 32
    %v1528 = vpop.permute.xlu0 %1527
    %v1530 = vadd.f32 %v1523, %v1528
    %v1531 = vxor.u32 %v1530, 2147483648
    %v1532 = vmul.f32 %v1531, 1.442695
    %v1533 = vpow.pop %v1532
    %v1534 = vadd.f32 %v1533, 1.0
    %v1535 = vrcp.pop %v1534
    %v1536 = vmul.f32 %v1534, %v1535
    %v1537 = vsub.f32 1.0, %v1536
    %v1538 = vmul.f32 %v1535, %v1537
    %v1539 = vadd.f32 %v1535, %v1538
    %vm1540 = vweird.f32 %v1534
    %vm1541 = vweird.f32 %v1535
    %vm1542 = vmor %vm1540, %vm1541
    %v1543 = vsel %vm1542, %v1535, %v1539
    %v1544 = vand.u32 2147483647, %v1534
    %vm1545 = vcmp.eq.f32.partialorder %v1544, 8.507059e+37
    %v1546 = vand.u32 %v1534, 2147483648
    %v1547 = vor.u32 1.1754944e-38, %v1546
    %v1548 = vsel %vm1545, %v1547, %v1543
    %v1549 = vmul.f32 1.0, %v1548
    %v1550 = vmul.f32 %v1530, %v1549
    %v1551 = vld [vmem:[%s11] sm:$0xff]
    %v1552 = vld [vmem:[%s11 + $0x8] sm:$0xff]
    %v1553 = vld [vmem:[%s11 + $0x10] sm:$0xff]
    %v1554 = vld [vmem:[%s11 + $0x18] sm:$0xff]
    %v1555 = vld [vmem:[#allocation16] sm:$0x1]
    %v1557 = vperm.slane %v1555, 0
    %1560 = vrot.lane.b32.xlu0 %v1550, 96
    %v1561 = vpop.permute.xlu0 %1560
    %v1562 = vsel %vm226, %v1561, 0
    %1564 = vmatpush.msra.mxu0 0.0
    %1565 = vmatpush.msra.mxu0 0.0
    %1566 = vmatpush.msra.mxu0 0.0
    %1567 = vmatpush.msra.mxu0 0.0
    %1568 = vmatpush.msra.mxu0 0.0
    %1569 = vmatpush.msra.mxu0 0.0
    %1570 = vmatpush.msra.mxu0 0.0
    %1571 = vmatpush.msra.mxu0 0.0
    %1572 = vmatpush.msra.mxu0 0.0
    %1573 = vmatpush.msra.mxu0 0.0
    %1574 = vmatpush.msra.mxu0 0.0
    %1575 = vmatpush.msra.mxu0 0.0
    %1576 = vmatpush.msra.mxu0 %v1554
    %1577 = vmatpush.msra.mxu0 %v1553
    %1578 = vmatpush.msra.mxu0 %v1552
    %1579 = vmatpush.msra.mxu0 %v1551
    %1580 = vmatmul.f32.gmra.mxu0 %v1562
    %v1581 = vpop.f32.mrf.mxu0
    %v1582 = vadd.f32 %v1557, %v1581
    %1583 = vdwg.mxu0
    %vm1584 = vcmask 9216
    %1585 = vst.msk [vmem:[#allocation18] sm:$0x3] %vm1584, %v1582
    // Predicated region
    $region86: #{forward.1} parent=1 // pred_check
      _
    $region87: #{forward.1} parent=1 // pred_check_branch
      %1587 = sbr.rel (0) target = $region89
    $region88: #{forward.1} parent=1 // pred_region
      %1589 = vsyncadd [#allocation6], 0
      %s1591 = sshll.u32 [#allocation18], 4
      %s1592 = int_to_ptr.vmem [resolvable:$true] %s1591
      %s1593 = sshll.u32 %s13, 4
      %s1594 = int_to_ptr.hbm [resolvable:$true] %s1593
      %1596 = dma.vmem_to_hbm [thread:$0]  %s1592, 32, %s1594, [#allocation6]
    $region89: #{forward.1} parent=1 // pred_fallthru
      _
    // Predicated region
    $region90: #{forward.1} parent=1 // pred_check
      _
    $region91: #{forward.1} parent=1 // pred_check_branch
      %1598 = sbr.rel (0) target = $region93
    $region92: #{forward.1} parent=1 // pred_region
      %1600 = vsyncadd [#allocation20], 0
      %s1602 = sshll.u32 [#allocation19], 4
      %s1603 = int_to_ptr.vmem [resolvable:$true] %s1602
      %s1604 = sshll.u32 %s14, 4
      %s1605 = int_to_ptr.hbm [resolvable:$true] %s1604
      %1607 = dma.vmem_to_hbm [thread:$0]  %s1603, 32, %s1605, [#allocation20]
    $region93: #{forward.1} parent=1 // pred_fallthru
      _
    // Predicated region
    $region94: #{forward.1} parent=1 // pred_check
      _
    $region95: #{forward.1} parent=1 // pred_check_branch
      %1609 = sbr.rel (0) target = $region97
    $region96: #{forward.1} parent=1 // pred_region
      %1611 = dma.done [#allocation6], 32
    $region97: #{forward.1} parent=1 // pred_fallthru
      _
    // Predicated region
    $region98: #{forward.1} parent=1 // pred_check
      _
    $region99: #{forward.1} parent=1 // pred_check_branch
      %1613 = sbr.rel (0) target = $region101
    $region100: #{forward.1} parent=1 // pred_region
      %1615 = dma.done [#allocation20], 32
    $region101: #{forward.1} parent=1 // pred_fallthru
      _
    %1616 = vsyncpa [#allocation5], 1
    %1617 = vsyncpa [#allocation8], 1
    %1618 = vsyncpa [#allocation11], 1
    %1619 = vsyncpa [#allocation14], 1
    %1620 = vsyncpa [#allocation17], 1
    %1621 = vsyncpa [#allocation6], 1
    %1622 = vsyncpa [#allocation20], 1

</llo_original>
